<compile_context>
chip_gen: v5e
topology: v5e:2x2
jax: 0.10.0
libtpu: 0.0.40
codegen_flags: <defaults>
</compile_context>

<pallas_src>
import functools
import math

import numpy as np

import jax
import jax.numpy as jnp
from jax.experimental import pallas as pl
from jax.experimental.pallas import tpu as pltpu

LANES = 128  # lane width of the packed parameter buffer


# ------------------------------ in-kernel ops -------------------------------

def _elu(x):
    # ELU(alpha=1.0); exp is an EUP op, selection is VPU.
    return jnp.where(x > 0, x, jnp.exp(x) - 1.0)


def _apply_conv(h, p_ref, m):
    """One Streamable(Conv1d | ConvTranspose1d) on a (C_in, L_in) activation.

    Packed-buffer slabs (all static row offsets, width <= 128):
      W slab : (K*C_out, C_in)   rows ordered tap-major
      b slab : (C_out, 1)
      G slab : (K*L_in, L_out)   one-hot gather (reflect pad) / scatter (stride
                                 upsample + trim), block-diagonal per batch.
    Compute: z = W_tall @ h  (one MXU push), then y = sum_k z_k @ G_k.
    """
    K, c_in, c_out = m["K"], m["c_in"], m["c_out"]
    l_in, l_out = m["l_in"], m["l_out"]

    wt = p_ref[m["w_off"]:m["w_off"] + K * c_out, 0:c_in]      # (K*C_out, C_in)
    b = p_ref[m["b_off"]:m["b_off"] + c_out, 0:1]              # (C_out, 1)

    z = jnp.dot(wt, h, preferred_element_type=jnp.float32)     # (K*C_out, L_in)
    if K == 1:                                                 # 1x1 conv
        return z + b

    g0 = m["g_off"]
    y = None
    for k in range(K):
        g = p_ref[g0 + k * l_in: g0 + (k + 1) * l_in, 0:l_out]  # (L_in, L_out)
        zk = z[k * c_out:(k + 1) * c_out, :]                    # (C_out, L_in)
        t = jnp.dot(zk, g, preferred_element_type=jnp.float32)  # exact (one-hot)
        y = t if y is None else y + t
    return y + b


def _decoder_kernel(plan, z_ref, p_ref, o_ref):
    """Whole SEANetDecoder forward, activations VMEM/vreg resident."""
    x = z_ref[...]                                    # (dimension, B*T_in)
    for op in plan:
        if op[0] == "res":                            # true_skip residual block
            m1, m2 = op[1], op[2]
            h = _apply_conv(_elu(x), p_ref, m1)
            h = _apply_conv(_elu(h), p_ref, m2)
            x = x + h
        else:                                         # conv / convtr
            m = op[1]
            h = _elu(x) if m["pre_elu"] else x
            x = _apply_conv(h, p_ref, m)
    o_ref[...] = x.astype(o_ref.dtype)


# --------------------------------- wrapper -----------------------------------

def seanet_decoder_forward(plan, packed, z):
    """z: (B, dimension, T_in) -> (B, channels, T_in * prod(ratios))."""
    B, D, T_in = z.shape
    last = plan[-1][1]
    c_out, l_out = last["c_out"], last["l_out"]
    T_out = l_out // B

    # Batch folded into the lane axis: x[c, b*T + t] = z[b, c, t].
    x2 = jnp.transpose(z, (1, 0, 2)).reshape(D, B * T_in)

    y2 = pl.pallas_call(
        functools.partial(_decoder_kernel, plan),
        out_shape=jax.ShapeDtypeStruct((c_out, l_out), jnp.float32),
        grid=(1,),
        in_specs=[
            pl.BlockSpec((D, B * T_in), lambda i: (0, 0)),
            pl.BlockSpec(packed.shape, lambda i: (0, 0)),   # one packed DMA
        ],
        out_specs=pl.BlockSpec((c_out, l_out), lambda i: (0, 0)),
        compiler_params=pltpu.CompilerParams(
            dimension_semantics=("arbitrary",),
            vmem_limit_bytes=32 * 1024 * 1024,
        ),
    )(x2, packed)

    return jnp.transpose(y2.reshape(c_out, B, T_out), (1, 0, 2))


# ------------------- host-side gather / scatter construction -----------------

def _conv_gather_np(T, K, dil, B):
    """One-hot reflect-pad gather matrices for a stride-1 Conv1d, block-diag
    over batch.  G[k, b*T + src, b*T + t] = 1."""
    k_eff = (K - 1) * dil + 1
    ptot = k_eff - 1
    pad_right = ptot // 2
    pad_left = ptot - pad_right
    G = np.zeros((K, B * T, B * T), np.float32)
    for k in range(K):
        for t in range(T):
            v = t + k * dil - pad_left
            if v < 0:
                v = -v
            elif v >= T:
                v = 2 * (T - 1) - v
            # TODO(synk): encodec zero-pads first when reflect pad >= length;
            # not needed for the lengths exercised here (pad < T always).
            for b in range(B):
                G[k, b * T + v, b * T + t] = 1.0
    return G


def _convtr_scatter_np(T, K, stride, B):
    """One-hot scatter matrices for ConvTranspose1d (symmetric trim)."""
    T_out = T * stride
    ptot = K - stride
    pad_right = ptot // 2
    pad_left = ptot - pad_right
    S = np.zeros((K, B * T, B * T_out), np.float32)
    for k in range(K):
        for l in range(T):
            t = l * stride + k - pad_left
            if 0 <= t < T_out:
                for b in range(B):
                    S[k, b * T + l, b * T_out + t] = 1.0
    return S


# --------------------------- parameter building ------------------------------

def build_layers(key, channels=1, dimension=32, n_filters=4,
                 n_residual_layers=1, ratios=(4, 2), kernel_size=7,
                 last_kernel_size=7, residual_kernel_size=3, dilation_base=2,
                 compress=2, inflating_factor=2):
    """Static layer list with weights w: (K, C_out, C_in), bias b: (C_out,).

    (PyTorch Conv1d weight (C_out,C_in,K) maps via transpose(2,0,1);
     ConvTranspose1d weight (C_in,C_out,K) via transpose(2,1,0).)
    """
    keys = iter(jax.random.split(key, 64))

    def make(kind, c_in, c_out, k, *, dil=1, stride=1, pre_elu=True):
        wk, bk = jax.random.split(next(keys))
        bound = 1.0 / math.sqrt(c_in * k)
        w = jax.random.uniform(wk, (k, c_out, c_in), jnp.float32, -bound, bound)
        b = jax.random.uniform(bk, (c_out,), jnp.float32, -bound, bound)
        return dict(kind=kind, k=k, dil=dil, stride=stride, c_in=c_in,
                    c_out=c_out, pre_elu=pre_elu, w=w, b=b)

    ops = []
    mult = inflating_factor ** len(ratios)
    ops.append(("conv", make("conv", dimension, mult * n_filters, kernel_size,
                             pre_elu=False)))
    for ratio in ratios:                       # decoder: ratios NOT reversed
        ops.append(("convtr", make("convtr", mult * n_filters,
                                   mult * n_filters // inflating_factor,
                                   ratio * inflating_factor, stride=ratio)))
        dim = mult * n_filters // inflating_factor
        hidden = dim // compress
        for j in range(n_residual_layers):     # SEANetResnetBlock (true_skip)
            a = make("conv", dim, hidden, residual_kernel_size,
                     dil=dilation_base ** j)
            c = make("conv", hidden, dim, 1)
            ops.append(("res", a, c))
        mult //= inflating_factor
    ops.append(("conv", make("conv", n_filters, channels, last_kernel_size,
                             pre_elu=True)))
    # lstm=0 and transformer_params=None in this config -> no extra modules.
    return tuple(ops)


def pack_for_kernel(ops, B, T_in):
    """Pack every layer's weights/biases + precomputed gather matrices into
    one (R, 128) f32 buffer; return (plan, packed)."""
    slabs = []
    row = 0

    def add(slab):
        nonlocal row
        slab = np.asarray(slab, np.float32)
        assert slab.ndim == 2 and slab.shape[1] <= LANES
        off = row
        slabs.append((off, slab))
        row += ((slab.shape[0] + 7) // 8) * 8          # 8-row aligned slabs
        return off

    def meta_for(lay, T):
        K, c_in, c_out = lay["k"], lay["c_in"], lay["c_out"]
        if lay["kind"] == "conv":
            L_in, L_out, T_next = B * T, B * T, T
            G = _conv_gather_np(T, K, lay["dil"], B) if K > 1 else None
        else:
            L_in = B * T
            L_out = L_in * lay["stride"]
            T_next = T * lay["stride"]
            G = _convtr_scatter_np(T, K, lay["stride"], B)
        w_off = add(np.asarray(lay["w"]).reshape(K * c_out, c_in))
        b_off = add(np.asarray(lay["b"]).reshape(c_out, 1))
        g_off = add(G.reshape(K * L_in, L_out)) if G is not None else -1
        m = dict(K=K, c_in=c_in, c_out=c_out, l_in=L_in, l_out=L_out,
                 w_off=w_off, b_off=b_off, g_off=g_off, pre_elu=lay["pre_elu"])
        return m, T_next

    plan = []
    T = T_in
    for op in ops:
        if op[0] == "res":
            m1, T = meta_for(op[1], T)
            m2, T = meta_for(op[2], T)
            plan.append(("res", m1, m2))
        else:
            m, T = meta_for(op[1], T)
            plan.append((op[0], m))

    R = ((row + 7) // 8) * 8
    packed = np.zeros((R, LANES), np.float32)
    for off, slab in slabs:
        packed[off:off + slab.shape[0], :slab.shape[1]] = slab
    return tuple(plan), jnp.asarray(packed)


# ------------------------------ JAX reference --------------------------------

_HI = jax.lax.Precision.HIGHEST


def _ref_conv1d(x, w, b, dil):
    K = w.shape[0]
    T = x.shape[-1]
    ptot = (K - 1) * dil
    pr = ptot // 2
    pl_ = ptot - pr
    xp = jnp.pad(x, ((0, 0), (0, 0), (pl_, pr)), mode="reflect") if ptot else x
    y = None
    for k in range(K):
        tap = xp[:, :, k * dil: k * dil + T]
        term = jnp.einsum("oc,bct->bot", w[k], tap, precision=_HI)
        y = term if y is None else y + term
    return y + b[None, :, None]


def _ref_convtr1d(x, w, b, stride):
    K, C_out, _ = w.shape
    B, _, T = x.shape
    T_full = (T - 1) * stride + K
    y = jnp.zeros((B, C_out, T_full), jnp.float32)
    for k in range(K):
        zk = jnp.einsum("oc,bct->bot", w[k], x, precision=_HI)
        y = y.at[:, :, k: k + (T - 1) * stride + 1: stride].add(zk)
    ptot = K - stride
    pr = ptot // 2
    pl_ = ptot - pr
    return y[:, :, pl_: T_full - pr] + b[None, :, None]


def _ref_apply(lay, x):
    h = jax.nn.elu(x) if lay["pre_elu"] else x
    if lay["kind"] == "conv":
        return _ref_conv1d(h, lay["w"], lay["b"], lay["dil"])
    return _ref_convtr1d(h, lay["w"], lay["b"], lay["stride"])


def ref_decoder_forward(ops, z):
    x = z
    for op in ops:
        if op[0] == "res":
            x = x + _ref_apply(op[2], _ref_apply(op[1], x))
        else:
            x = _ref_apply(op[1], x)
    return x


# ----------------------------------- main ------------------------------------

if __name__ == "__main__":
    key = jax.random.PRNGKey(0)
    pkey, zkey = jax.random.split(key)

    ops = build_layers(pkey)
    B, D, T_in = 2, 32, 8                       # hop_length = prod(ratios) = 8
    plan, packed = pack_for_kernel(ops, B=B, T_in=T_in)

    z = jax.random.normal(zkey, (B, D, T_in), jnp.float32)

    fwd = jax.jit(lambda p, zz: seanet_decoder_forward(plan, p, zz))
    y = fwd(packed, z)
    jax.block_until_ready(y)
    assert y.shape == (B, 1, T_in * 8), y.shape
    assert y.dtype == jnp.float32

    y_ref = ref_decoder_forward(ops, z)
    rel_err = float(jnp.linalg.norm(y - y_ref) /
                    (jnp.linalg.norm(y_ref) + 1e-12))
    # Kernel matmuls use default MXU precision; gathers are one-hot (exact).
    assert rel_err < 2e-2, rel_err
    print("KERNEL_OK")
</pallas_src>

<mosaic_0001>
module attributes {stable_mosaic.version = 11 : i64} {
  func.func @_decoder_kernel(%arg0: i32, %arg1: memref<32x16xf32, #tpu.memory_space<vmem>>, %arg2: memref<2280x128xf32, #tpu.memory_space<vmem>>, %arg3: memref<1x128xf32, #tpu.memory_space<vmem>>) attributes {dimension_semantics = [#tpu.dimension_semantics<arbitrary>], iteration_bounds = array<i64: 1>, scalar_prefetch = 0 : i64, scratch_operands = 0 : i64, tpu.core_type = #tpu.core_type<tc>, window_params = [{pipeline_mode = #tpu.pipeline_mode<synchronous>, transform_indices = @transform_0, window_bounds = array<i64: 32, 16>}, {pipeline_mode = #tpu.pipeline_mode<synchronous>, transform_indices = @transform_1, window_bounds = array<i64: 2280, 128>}, {pipeline_mode = #tpu.pipeline_mode<synchronous>, transform_indices = @transform_2, window_bounds = array<i64: 1, 128>}]} {
    %c0 = arith.constant 0 : index
    %c0_0 = arith.constant 0 : index
    %0 = vector.load %arg1[%c0, %c0_0] : memref<32x16xf32, #tpu.memory_space<vmem>>, vector<32x16xf32>
    %c0_1 = arith.constant 0 : index
    %c0_2 = arith.constant 0 : index
    %1 = vector.load %arg2[%c0_1, %c0_2] : memref<2280x128xf32, #tpu.memory_space<vmem>>, vector<112x32xf32>
    %c112 = arith.constant 112 : index
    %c0_3 = arith.constant 0 : index
    %2 = vector.load %arg2[%c112, %c0_3] : memref<2280x128xf32, #tpu.memory_space<vmem>>, vector<16x1xf32>
    %cst = arith.constant dense<0.000000e+00> : vector<112x16xf32>
    %3 = tpu.matmul %1, %0, %cst {dimension_numbers = #tpu.dot_dimension_numbers<[1], [0], [0], [1], [0, 0, 1, 1], [], []>} : vector<112x32xf32>, vector<32x16xf32>, vector<112x16xf32> -> vector<112x16xf32>
    %c128 = arith.constant 128 : index
    %c0_4 = arith.constant 0 : index
    %4 = vector.load %arg2[%c128, %c0_4] : memref<2280x128xf32, #tpu.memory_space<vmem>>, vector<16x16xf32>
    %5 = vector.extract_strided_slice %3 {offsets = [0, 0], sizes = [16, 16], strides = [1, 1]} : vector<112x16xf32> to vector<16x16xf32>
    %cst_5 = arith.constant dense<0.000000e+00> : vector<16x16xf32>
    %6 = tpu.matmul %5, %4, %cst_5 {dimension_numbers = #tpu.dot_dimension_numbers<[1], [0], [0], [1], [0, 0, 1, 1], [], []>} : vector<16x16xf32>, vector<16x16xf32>, vector<16x16xf32> -> vector<16x16xf32>
    %c144 = arith.constant 144 : index
    %c0_6 = arith.constant 0 : index
    %7 = vector.load %arg2[%c144, %c0_6] : memref<2280x128xf32, #tpu.memory_space<vmem>>, vector<16x16xf32>
    %8 = vector.extract_strided_slice %3 {offsets = [16, 0], sizes = [16, 16], strides = [1, 1]} : vector<112x16xf32> to vector<16x16xf32>
    %cst_7 = arith.constant dense<0.000000e+00> : vector<16x16xf32>
    %9 = tpu.matmul %8, %7, %cst_7 {dimension_numbers = #tpu.dot_dimension_numbers<[1], [0], [0], [1], [0, 0, 1, 1], [], []>} : vector<16x16xf32>, vector<16x16xf32>, vector<16x16xf32> -> vector<16x16xf32>
    %10 = arith.addf %6, %9 : vector<16x16xf32>
    %c160 = arith.constant 160 : index
    %c0_8 = arith.constant 0 : index
    %11 = vector.load %arg2[%c160, %c0_8] : memref<2280x128xf32, #tpu.memory_space<vmem>>, vector<16x16xf32>
    %12 = vector.extract_strided_slice %3 {offsets = [32, 0], sizes = [16, 16], strides = [1, 1]} : vector<112x16xf32> to vector<16x16xf32>
    %cst_9 = arith.constant dense<0.000000e+00> : vector<16x16xf32>
    %13 = tpu.matmul %12, %11, %cst_9 {dimension_numbers = #tpu.dot_dimension_numbers<[1], [0], [0], [1], [0, 0, 1, 1], [], []>} : vector<16x16xf32>, vector<16x16xf32>, vector<16x16xf32> -> vector<16x16xf32>
    %14 = arith.addf %10, %13 : vector<16x16xf32>
    %c176 = arith.constant 176 : index
    %c0_10 = arith.constant 0 : index
    %15 = vector.load %arg2[%c176, %c0_10] : memref<2280x128xf32, #tpu.memory_space<vmem>>, vector<16x16xf32>
    %16 = vector.extract_strided_slice %3 {offsets = [48, 0], sizes = [16, 16], strides = [1, 1]} : vector<112x16xf32> to vector<16x16xf32>
    %cst_11 = arith.constant dense<0.000000e+00> : vector<16x16xf32>
    %17 = tpu.matmul %16, %15, %cst_11 {dimension_numbers = #tpu.dot_dimension_numbers<[1], [0], [0], [1], [0, 0, 1, 1], [], []>} : vector<16x16xf32>, vector<16x16xf32>, vector<16x16xf32> -> vector<16x16xf32>
    %18 = arith.addf %14, %17 : vector<16x16xf32>
    %c192 = arith.constant 192 : index
    %c0_12 = arith.constant 0 : index
    %19 = vector.load %arg2[%c192, %c0_12] : memref<2280x128xf32, #tpu.memory_space<vmem>>, vector<16x16xf32>
    %20 = vector.extract_strided_slice %3 {offsets = [64, 0], sizes = [16, 16], strides = [1, 1]} : vector<112x16xf32> to vector<16x16xf32>
    %cst_13 = arith.constant dense<0.000000e+00> : vector<16x16xf32>
    %21 = tpu.matmul %20, %19, %cst_13 {dimension_numbers = #tpu.dot_dimension_numbers<[1], [0], [0], [1], [0, 0, 1, 1], [], []>} : vector<16x16xf32>, vector<16x16xf32>, vector<16x16xf32> -> vector<16x16xf32>
    %22 = arith.addf %18, %21 : vector<16x16xf32>
    %c208 = arith.constant 208 : index
    %c0_14 = arith.constant 0 : index
    %23 = vector.load %arg2[%c208, %c0_14] : memref<2280x128xf32, #tpu.memory_space<vmem>>, vector<16x16xf32>
    %24 = vector.extract_strided_slice %3 {offsets = [80, 0], sizes = [16, 16], strides = [1, 1]} : vector<112x16xf32> to vector<16x16xf32>
    %cst_15 = arith.constant dense<0.000000e+00> : vector<16x16xf32>
    %25 = tpu.matmul %24, %23, %cst_15 {dimension_numbers = #tpu.dot_dimension_numbers<[1], [0], [0], [1], [0, 0, 1, 1], [], []>} : vector<16x16xf32>, vector<16x16xf32>, vector<16x16xf32> -> vector<16x16xf32>
    %26 = arith.addf %22, %25 : vector<16x16xf32>
    %c224 = arith.constant 224 : index
    %c0_16 = arith.constant 0 : index
    %27 = vector.load %arg2[%c224, %c0_16] : memref<2280x128xf32, #tpu.memory_space<vmem>>, vector<16x16xf32>
    %28 = vector.extract_strided_slice %3 {offsets = [96, 0], sizes = [16, 16], strides = [1, 1]} : vector<112x16xf32> to vector<16x16xf32>
    %cst_17 = arith.constant dense<0.000000e+00> : vector<16x16xf32>
    %29 = tpu.matmul %28, %27, %cst_17 {dimension_numbers = #tpu.dot_dimension_numbers<[1], [0], [0], [1], [0, 0, 1, 1], [], []>} : vector<16x16xf32>, vector<16x16xf32>, vector<16x16xf32> -> vector<16x16xf32>
    %30 = arith.addf %26, %29 : vector<16x16xf32>
    %31 = vector.broadcast %2 : vector<16x1xf32> to vector<16x16xf32>
    %32 = arith.addf %30, %31 : vector<16x16xf32>
    %cst_18 = arith.constant 0.000000e+00 : f32
    %33 = vector.broadcast %cst_18 : f32 to vector<16x16xf32>
    %34 = arith.cmpf ogt, %32, %33 : vector<16x16xf32>
    %35 = math.exp %32 : vector<16x16xf32>
    %cst_19 = arith.constant 1.000000e+00 : f32
    %36 = vector.broadcast %cst_19 : f32 to vector<16x16xf32>
    %37 = arith.subf %35, %36 : vector<16x16xf32>
    %38 = arith.select %34, %32, %37 : vector<16x16xi1>, vector<16x16xf32>
    %c240 = arith.constant 240 : index
    %c0_20 = arith.constant 0 : index
    %39 = vector.load %arg2[%c240, %c0_20] : memref<2280x128xf32, #tpu.memory_space<vmem>>, vector<64x16xf32>
    %c304 = arith.constant 304 : index
    %c0_21 = arith.constant 0 : index
    %40 = vector.load %arg2[%c304, %c0_21] : memref<2280x128xf32, #tpu.memory_space<vmem>>, vector<8x1xf32>
    %cst_22 = arith.constant dense<0.000000e+00> : vector<64x16xf32>
    %41 = tpu.matmul %39, %38, %cst_22 {dimension_numbers = #tpu.dot_dimension_numbers<[1], [0], [0], [1], [0, 0, 1, 1], [], []>} : vector<64x16xf32>, vector<16x16xf32>, vector<64x16xf32> -> vector<64x16xf32>
    %c312 = arith.constant 312 : index
    %c0_23 = arith.constant 0 : index
    %42 = vector.load %arg2[%c312, %c0_23] : memref<2280x128xf32, #tpu.memory_space<vmem>>, vector<16x64xf32>
    %43 = vector.extract_strided_slice %41 {offsets = [0, 0], sizes = [8, 16], strides = [1, 1]} : vector<64x16xf32> to vector<8x16xf32>
    %cst_24 = arith.constant dense<0.000000e+00> : vector<8x64xf32>
    %44 = tpu.matmul %43, %42, %cst_24 {dimension_numbers = #tpu.dot_dimension_numbers<[1], [0], [0], [1], [0, 0, 1, 1], [], []>} : vector<8x16xf32>, vector<16x64xf32>, vector<8x64xf32> -> vector<8x64xf32>
    %c328 = arith.constant 328 : index
    %c0_25 = arith.constant 0 : index
    %45 = vector.load %arg2[%c328, %c0_25] : memref<2280x128xf32, #tpu.memory_space<vmem>>, vector<16x64xf32>
    %46 = vector.extract_strided_slice %41 {offsets = [8, 0], sizes = [8, 16], strides = [1, 1]} : vector<64x16xf32> to vector<8x16xf32>
    %cst_26 = arith.constant dense<0.000000e+00> : vector<8x64xf32>
    %47 = tpu.matmul %46, %45, %cst_26 {dimension_numbers = #tpu.dot_dimension_numbers<[1], [0], [0], [1], [0, 0, 1, 1], [], []>} : vector<8x16xf32>, vector<16x64xf32>, vector<8x64xf32> -> vector<8x64xf32>
    %48 = arith.addf %44, %47 : vector<8x64xf32>
    %c344 = arith.constant 344 : index
    %c0_27 = arith.constant 0 : index
    %49 = vector.load %arg2[%c344, %c0_27] : memref<2280x128xf32, #tpu.memory_space<vmem>>, vector<16x64xf32>
    %50 = vector.extract_strided_slice %41 {offsets = [16, 0], sizes = [8, 16], strides = [1, 1]} : vector<64x16xf32> to vector<8x16xf32>
    %cst_28 = arith.constant dense<0.000000e+00> : vector<8x64xf32>
    %51 = tpu.matmul %50, %49, %cst_28 {dimension_numbers = #tpu.dot_dimension_numbers<[1], [0], [0], [1], [0, 0, 1, 1], [], []>} : vector<8x16xf32>, vector<16x64xf32>, vector<8x64xf32> -> vector<8x64xf32>
    %52 = arith.addf %48, %51 : vector<8x64xf32>
    %c360 = arith.constant 360 : index
    %c0_29 = arith.constant 0 : index
    %53 = vector.load %arg2[%c360, %c0_29] : memref<2280x128xf32, #tpu.memory_space<vmem>>, vector<16x64xf32>
    %54 = vector.extract_strided_slice %41 {offsets = [24, 0], sizes = [8, 16], strides = [1, 1]} : vector<64x16xf32> to vector<8x16xf32>
    %cst_30 = arith.constant dense<0.000000e+00> : vector<8x64xf32>
    %55 = tpu.matmul %54, %53, %cst_30 {dimension_numbers = #tpu.dot_dimension_numbers<[1], [0], [0], [1], [0, 0, 1, 1], [], []>} : vector<8x16xf32>, vector<16x64xf32>, vector<8x64xf32> -> vector<8x64xf32>
    %56 = arith.addf %52, %55 : vector<8x64xf32>
    %c376 = arith.constant 376 : index
    %c0_31 = arith.constant 0 : index
    %57 = vector.load %arg2[%c376, %c0_31] : memref<2280x128xf32, #tpu.memory_space<vmem>>, vector<16x64xf32>
    %58 = vector.extract_strided_slice %41 {offsets = [32, 0], sizes = [8, 16], strides = [1, 1]} : vector<64x16xf32> to vector<8x16xf32>
    %cst_32 = arith.constant dense<0.000000e+00> : vector<8x64xf32>
    %59 = tpu.matmul %58, %57, %cst_32 {dimension_numbers = #tpu.dot_dimension_numbers<[1], [0], [0], [1], [0, 0, 1, 1], [], []>} : vector<8x16xf32>, vector<16x64xf32>, vector<8x64xf32> -> vector<8x64xf32>
    %60 = arith.addf %56, %59 : vector<8x64xf32>
    %c392 = arith.constant 392 : index
    %c0_33 = arith.constant 0 : index
    %61 = vector.load %arg2[%c392, %c0_33] : memref<2280x128xf32, #tpu.memory_space<vmem>>, vector<16x64xf32>
    %62 = vector.extract_strided_slice %41 {offsets = [40, 0], sizes = [8, 16], strides = [1, 1]} : vector<64x16xf32> to vector<8x16xf32>
    %cst_34 = arith.constant dense<0.000000e+00> : vector<8x64xf32>
    %63 = tpu.matmul %62, %61, %cst_34 {dimension_numbers = #tpu.dot_dimension_numbers<[1], [0], [0], [1], [0, 0, 1, 1], [], []>} : vector<8x16xf32>, vector<16x64xf32>, vector<8x64xf32> -> vector<8x64xf32>
    %64 = arith.addf %60, %63 : vector<8x64xf32>
    %c408 = arith.constant 408 : index
    %c0_35 = arith.constant 0 : index
    %65 = vector.load %arg2[%c408, %c0_35] : memref<2280x128xf32, #tpu.memory_space<vmem>>, vector<16x64xf32>
    %66 = vector.extract_strided_slice %41 {offsets = [48, 0], sizes = [8, 16], strides = [1, 1]} : vector<64x16xf32> to vector<8x16xf32>
    %cst_36 = arith.constant dense<0.000000e+00> : vector<8x64xf32>
    %67 = tpu.matmul %66, %65, %cst_36 {dimension_numbers = #tpu.dot_dimension_numbers<[1], [0], [0], [1], [0, 0, 1, 1], [], []>} : vector<8x16xf32>, vector<16x64xf32>, vector<8x64xf32> -> vector<8x64xf32>
    %68 = arith.addf %64, %67 : vector<8x64xf32>
    %c424 = arith.constant 424 : index
    %c0_37 = arith.constant 0 : index
    %69 = vector.load %arg2[%c424, %c0_37] : memref<2280x128xf32, #tpu.memory_space<vmem>>, vector<16x64xf32>
    %70 = vector.extract_strided_slice %41 {offsets = [56, 0], sizes = [8, 16], strides = [1, 1]} : vector<64x16xf32> to vector<8x16xf32>
    %cst_38 = arith.constant dense<0.000000e+00> : vector<8x64xf32>
    %71 = tpu.matmul %70, %69, %cst_38 {dimension_numbers = #tpu.dot_dimension_numbers<[1], [0], [0], [1], [0, 0, 1, 1], [], []>} : vector<8x16xf32>, vector<16x64xf32>, vector<8x64xf32> -> vector<8x64xf32>
    %72 = arith.addf %68, %71 : vector<8x64xf32>
    %73 = vector.broadcast %40 : vector<8x1xf32> to vector<8x64xf32>
    %74 = arith.addf %72, %73 : vector<8x64xf32>
    %cst_39 = arith.constant 0.000000e+00 : f32
    %75 = vector.broadcast %cst_39 : f32 to vector<8x64xf32>
    %76 = arith.cmpf ogt, %74, %75 : vector<8x64xf32>
    %77 = math.exp %74 : vector<8x64xf32>
    %cst_40 = arith.constant 1.000000e+00 : f32
    %78 = vector.broadcast %cst_40 : f32 to vector<8x64xf32>
    %79 = arith.subf %77, %78 : vector<8x64xf32>
    %80 = arith.select %76, %74, %79 : vector<8x64xi1>, vector<8x64xf32>
    %c440 = arith.constant 440 : index
    %c0_41 = arith.constant 0 : index
    %81 = vector.load %arg2[%c440, %c0_41] : memref<2280x128xf32, #tpu.memory_space<vmem>>, vector<12x8xf32>
    %c456 = arith.constant 456 : index
    %c0_42 = arith.constant 0 : index
    %82 = vector.load %arg2[%c456, %c0_42] : memref<2280x128xf32, #tpu.memory_space<vmem>>, vector<4x1xf32>
    %cst_43 = arith.constant dense<0.000000e+00> : vector<12x64xf32>
    %83 = tpu.matmul %81, %80, %cst_43 {dimension_numbers = #tpu.dot_dimension_numbers<[1], [0], [0], [1], [0, 0, 1, 1], [], []>} : vector<12x8xf32>, vector<8x64xf32>, vector<12x64xf32> -> vector<12x64xf32>
    %c464 = arith.constant 464 : index
    %c0_44 = arith.constant 0 : index
    %84 = vector.load %arg2[%c464, %c0_44] : memref<2280x128xf32, #tpu.memory_space<vmem>>, vector<64x64xf32>
    %85 = vector.extract_strided_slice %83 {offsets = [0, 0], sizes = [4, 64], strides = [1, 1]} : vector<12x64xf32> to vector<4x64xf32>
    %cst_45 = arith.constant dense<0.000000e+00> : vector<4x64xf32>
    %86 = tpu.matmul %85, %84, %cst_45 {dimension_numbers = #tpu.dot_dimension_numbers<[1], [0], [0], [1], [0, 0, 1, 1], [], []>} : vector<4x64xf32>, vector<64x64xf32>, vector<4x64xf32> -> vector<4x64xf32>
    %c528 = arith.constant 528 : index
    %c0_46 = arith.constant 0 : index
    %87 = vector.load %arg2[%c528, %c0_46] : memref<2280x128xf32, #tpu.memory_space<vmem>>, vector<64x64xf32>
    %88 = vector.extract_strided_slice %83 {offsets = [4, 0], sizes = [4, 64], strides = [1, 1]} : vector<12x64xf32> to vector<4x64xf32>
    %cst_47 = arith.constant dense<0.000000e+00> : vector<4x64xf32>
    %89 = tpu.matmul %88, %87, %cst_47 {dimension_numbers = #tpu.dot_dimension_numbers<[1], [0], [0], [1], [0, 0, 1, 1], [], []>} : vector<4x64xf32>, vector<64x64xf32>, vector<4x64xf32> -> vector<4x64xf32>
    %90 = arith.addf %86, %89 : vector<4x64xf32>
    %c592 = arith.constant 592 : index
    %c0_48 = arith.constant 0 : index
    %91 = vector.load %arg2[%c592, %c0_48] : memref<2280x128xf32, #tpu.memory_space<vmem>>, vector<64x64xf32>
    %92 = vector.extract_strided_slice %83 {offsets = [8, 0], sizes = [4, 64], strides = [1, 1]} : vector<12x64xf32> to vector<4x64xf32>
    %cst_49 = arith.constant dense<0.000000e+00> : vector<4x64xf32>
    %93 = tpu.matmul %92, %91, %cst_49 {dimension_numbers = #tpu.dot_dimension_numbers<[1], [0], [0], [1], [0, 0, 1, 1], [], []>} : vector<4x64xf32>, vector<64x64xf32>, vector<4x64xf32> -> vector<4x64xf32>
    %94 = arith.addf %90, %93 : vector<4x64xf32>
    %95 = vector.broadcast %82 : vector<4x1xf32> to vector<4x64xf32>
    %96 = arith.addf %94, %95 : vector<4x64xf32>
    %cst_50 = arith.constant 0.000000e+00 : f32
    %97 = vector.broadcast %cst_50 : f32 to vector<4x64xf32>
    %98 = arith.cmpf ogt, %96, %97 : vector<4x64xf32>
    %99 = math.exp %96 : vector<4x64xf32>
    %cst_51 = arith.constant 1.000000e+00 : f32
    %100 = vector.broadcast %cst_51 : f32 to vector<4x64xf32>
    %101 = arith.subf %99, %100 : vector<4x64xf32>
    %102 = arith.select %98, %96, %101 : vector<4x64xi1>, vector<4x64xf32>
    %c656 = arith.constant 656 : index
    %c0_52 = arith.constant 0 : index
    %103 = vector.load %arg2[%c656, %c0_52] : memref<2280x128xf32, #tpu.memory_space<vmem>>, vector<8x4xf32>
    %c664 = arith.constant 664 : index
    %c0_53 = arith.constant 0 : index
    %104 = vector.load %arg2[%c664, %c0_53] : memref<2280x128xf32, #tpu.memory_space<vmem>>, vector<8x1xf32>
    %cst_54 = arith.constant dense<0.000000e+00> : vector<8x64xf32>
    %105 = tpu.matmul %103, %102, %cst_54 {dimension_numbers = #tpu.dot_dimension_numbers<[1], [0], [0], [1], [0, 0, 1, 1], [], []>} : vector<8x4xf32>, vector<4x64xf32>, vector<8x64xf32> -> vector<8x64xf32>
    %106 = vector.broadcast %104 : vector<8x1xf32> to vector<8x64xf32>
    %107 = arith.addf %105, %106 : vector<8x64xf32>
    %108 = arith.addf %74, %107 : vector<8x64xf32>
    %cst_55 = arith.constant 0.000000e+00 : f32
    %109 = vector.broadcast %cst_55 : f32 to vector<8x64xf32>
    %110 = arith.cmpf ogt, %108, %109 : vector<8x64xf32>
    %111 = math.exp %108 : vector<8x64xf32>
    %cst_56 = arith.constant 1.000000e+00 : f32
    %112 = vector.broadcast %cst_56 : f32 to vector<8x64xf32>
    %113 = arith.subf %111, %112 : vector<8x64xf32>
    %114 = arith.select %110, %108, %113 : vector<8x64xi1>, vector<8x64xf32>
    %c672 = arith.constant 672 : index
    %c0_57 = arith.constant 0 : index
    %115 = vector.load %arg2[%c672, %c0_57] : memref<2280x128xf32, #tpu.memory_space<vmem>>, vector<16x8xf32>
    %c688 = arith.constant 688 : index
    %c0_58 = arith.constant 0 : index
    %116 = vector.load %arg2[%c688, %c0_58] : memref<2280x128xf32, #tpu.memory_space<vmem>>, vector<4x1xf32>
    %cst_59 = arith.constant dense<0.000000e+00> : vector<16x64xf32>
    %117 = tpu.matmul %115, %114, %cst_59 {dimension_numbers = #tpu.dot_dimension_numbers<[1], [0], [0], [1], [0, 0, 1, 1], [], []>} : vector<16x8xf32>, vector<8x64xf32>, vector<16x64xf32> -> vector<16x64xf32>
    %c696 = arith.constant 696 : index
    %c0_60 = arith.constant 0 : index
    %118 = vector.load %arg2[%c696, %c0_60] : memref<2280x128xf32, #tpu.memory_space<vmem>>, vector<64x128xf32>
    %119 = vector.extract_strided_slice %117 {offsets = [0, 0], sizes = [4, 64], strides = [1, 1]} : vector<16x64xf32> to vector<4x64xf32>
    %cst_61 = arith.constant dense<0.000000e+00> : vector<4x128xf32>
    %120 = tpu.matmul %119, %118, %cst_61 {dimension_numbers = #tpu.dot_dimension_numbers<[1], [0], [0], [1], [0, 0, 1, 1], [], []>} : vector<4x64xf32>, vector<64x128xf32>, vector<4x128xf32> -> vector<4x128xf32>
    %c760 = arith.constant 760 : index
    %c0_62 = arith.constant 0 : index
    %121 = vector.load %arg2[%c760, %c0_62] : memref<2280x128xf32, #tpu.memory_space<vmem>>, vector<64x128xf32>
    %122 = vector.extract_strided_slice %117 {offsets = [4, 0], sizes = [4, 64], strides = [1, 1]} : vector<16x64xf32> to vector<4x64xf32>
    %cst_63 = arith.constant dense<0.000000e+00> : vector<4x128xf32>
    %123 = tpu.matmul %122, %121, %cst_63 {dimension_numbers = #tpu.dot_dimension_numbers<[1], [0], [0], [1], [0, 0, 1, 1], [], []>} : vector<4x64xf32>, vector<64x128xf32>, vector<4x128xf32> -> vector<4x128xf32>
    %124 = arith.addf %120, %123 : vector<4x128xf32>
    %c824 = arith.constant 824 : index
    %c0_64 = arith.constant 0 : index
    %125 = vector.load %arg2[%c824, %c0_64] : memref<2280x128xf32, #tpu.memory_space<vmem>>, vector<64x128xf32>
    %126 = vector.extract_strided_slice %117 {offsets = [8, 0], sizes = [4, 64], strides = [1, 1]} : vector<16x64xf32> to vector<4x64xf32>
    %cst_65 = arith.constant dense<0.000000e+00> : vector<4x128xf32>
    %127 = tpu.matmul %126, %125, %cst_65 {dimension_numbers = #tpu.dot_dimension_numbers<[1], [0], [0], [1], [0, 0, 1, 1], [], []>} : vector<4x64xf32>, vector<64x128xf32>, vector<4x128xf32> -> vector<4x128xf32>
    %128 = arith.addf %124, %127 : vector<4x128xf32>
    %c888 = arith.constant 888 : index
    %c0_66 = arith.constant 0 : index
    %129 = vector.load %arg2[%c888, %c0_66] : memref<2280x128xf32, #tpu.memory_space<vmem>>, vector<64x128xf32>
    %130 = vector.extract_strided_slice %117 {offsets = [12, 0], sizes = [4, 64], strides = [1, 1]} : vector<16x64xf32> to vector<4x64xf32>
    %cst_67 = arith.constant dense<0.000000e+00> : vector<4x128xf32>
    %131 = tpu.matmul %130, %129, %cst_67 {dimension_numbers = #tpu.dot_dimension_numbers<[1], [0], [0], [1], [0, 0, 1, 1], [], []>} : vector<4x64xf32>, vector<64x128xf32>, vector<4x128xf32> -> vector<4x128xf32>
    %132 = arith.addf %128, %131 : vector<4x128xf32>
    %133 = vector.broadcast %116 : vector<4x1xf32> to vector<4x128xf32>
    %134 = arith.addf %132, %133 : vector<4x128xf32>
    %cst_68 = arith.constant 0.000000e+00 : f32
    %135 = vector.broadcast %cst_68 : f32 to vector<4x128xf32>
    %136 = arith.cmpf ogt, %134, %135 : vector<4x128xf32>
    %137 = math.exp %134 : vector<4x128xf32>
    %cst_69 = arith.constant 1.000000e+00 : f32
    %138 = vector.broadcast %cst_69 : f32 to vector<4x128xf32>
    %139 = arith.subf %137, %138 : vector<4x128xf32>
    %140 = arith.select %136, %134, %139 : vector<4x128xi1>, vector<4x128xf32>
    %c952 = arith.constant 952 : index
    %c0_70 = arith.constant 0 : index
    %141 = vector.load %arg2[%c952, %c0_70] : memref<2280x128xf32, #tpu.memory_space<vmem>>, vector<6x4xf32>
    %c960 = arith.constant 960 : index
    %c0_71 = arith.constant 0 : index
    %142 = vector.load %arg2[%c960, %c0_71] : memref<2280x128xf32, #tpu.memory_space<vmem>>, vector<2x1xf32>
    %cst_72 = arith.constant dense<0.000000e+00> : vector<6x128xf32>
    %143 = tpu.matmul %141, %140, %cst_72 {dimension_numbers = #tpu.dot_dimension_numbers<[1], [0], [0], [1], [0, 0, 1, 1], [], []>} : vector<6x4xf32>, vector<4x128xf32>, vector<6x128xf32> -> vector<6x128xf32>
    %c968 = arith.constant 968 : index
    %c0_73 = arith.constant 0 : index
    %144 = vector.load %arg2[%c968, %c0_73] : memref<2280x128xf32, #tpu.memory_space<vmem>>, vector<128x128xf32>
    %145 = vector.extract_strided_slice %143 {offsets = [0, 0], sizes = [2, 128], strides = [1, 1]} : vector<6x128xf32> to vector<2x128xf32>
    %cst_74 = arith.constant dense<0.000000e+00> : vector<2x128xf32>
    %146 = tpu.matmul %145, %144, %cst_74 {dimension_numbers = #tpu.dot_dimension_numbers<[1], [0], [0], [1], [0, 0, 1, 1], [], []>} : vector<2x128xf32>, vector<128x128xf32>, vector<2x128xf32> -> vector<2x128xf32>
    %c1096 = arith.constant 1096 : index
    %c0_75 = arith.constant 0 : index
    %147 = vector.load %arg2[%c1096, %c0_75] : memref<2280x128xf32, #tpu.memory_space<vmem>>, vector<128x128xf32>
    %148 = vector.extract_strided_slice %143 {offsets = [2, 0], sizes = [2, 128], strides = [1, 1]} : vector<6x128xf32> to vector<2x128xf32>
    %cst_76 = arith.constant dense<0.000000e+00> : vector<2x128xf32>
    %149 = tpu.matmul %148, %147, %cst_76 {dimension_numbers = #tpu.dot_dimension_numbers<[1], [0], [0], [1], [0, 0, 1, 1], [], []>} : vector<2x128xf32>, vector<128x128xf32>, vector<2x128xf32> -> vector<2x128xf32>
    %150 = arith.addf %146, %149 : vector<2x128xf32>
    %c1224 = arith.constant 1224 : index
    %c0_77 = arith.constant 0 : index
    %151 = vector.load %arg2[%c1224, %c0_77] : memref<2280x128xf32, #tpu.memory_space<vmem>>, vector<128x128xf32>
    %152 = vector.extract_strided_slice %143 {offsets = [4, 0], sizes = [2, 128], strides = [1, 1]} : vector<6x128xf32> to vector<2x128xf32>
    %cst_78 = arith.constant dense<0.000000e+00> : vector<2x128xf32>
    %153 = tpu.matmul %152, %151, %cst_78 {dimension_numbers = #tpu.dot_dimension_numbers<[1], [0], [0], [1], [0, 0, 1, 1], [], []>} : vector<2x128xf32>, vector<128x128xf32>, vector<2x128xf32> -> vector<2x128xf32>
    %154 = arith.addf %150, %153 : vector<2x128xf32>
    %155 = vector.broadcast %142 : vector<2x1xf32> to vector<2x128xf32>
    %156 = arith.addf %154, %155 : vector<2x128xf32>
    %cst_79 = arith.constant 0.000000e+00 : f32
    %157 = vector.broadcast %cst_79 : f32 to vector<2x128xf32>
    %158 = arith.cmpf ogt, %156, %157 : vector<2x128xf32>
    %159 = math.exp %156 : vector<2x128xf32>
    %cst_80 = arith.constant 1.000000e+00 : f32
    %160 = vector.broadcast %cst_80 : f32 to vector<2x128xf32>
    %161 = arith.subf %159, %160 : vector<2x128xf32>
    %162 = arith.select %158, %156, %161 : vector<2x128xi1>, vector<2x128xf32>
    %c1352 = arith.constant 1352 : index
    %c0_81 = arith.constant 0 : index
    %163 = vector.load %arg2[%c1352, %c0_81] : memref<2280x128xf32, #tpu.memory_space<vmem>>, vector<4x2xf32>
    %c1360 = arith.constant 1360 : index
    %c0_82 = arith.constant 0 : index
    %164 = vector.load %arg2[%c1360, %c0_82] : memref<2280x128xf32, #tpu.memory_space<vmem>>, vector<4x1xf32>
    %cst_83 = arith.constant dense<0.000000e+00> : vector<4x128xf32>
    %165 = tpu.matmul %163, %162, %cst_83 {dimension_numbers = #tpu.dot_dimension_numbers<[1], [0], [0], [1], [0, 0, 1, 1], [], []>} : vector<4x2xf32>, vector<2x128xf32>, vector<4x128xf32> -> vector<4x128xf32>
    %166 = vector.broadcast %164 : vector<4x1xf32> to vector<4x128xf32>
    %167 = arith.addf %165, %166 : vector<4x128xf32>
    %168 = arith.addf %134, %167 : vector<4x128xf32>
    %cst_84 = arith.constant 0.000000e+00 : f32
    %169 = vector.broadcast %cst_84 : f32 to vector<4x128xf32>
    %170 = arith.cmpf ogt, %168, %169 : vector<4x128xf32>
    %171 = math.exp %168 : vector<4x128xf32>
    %cst_85 = arith.constant 1.000000e+00 : f32
    %172 = vector.broadcast %cst_85 : f32 to vector<4x128xf32>
    %173 = arith.subf %171, %172 : vector<4x128xf32>
    %174 = arith.select %170, %168, %173 : vector<4x128xi1>, vector<4x128xf32>
    %c1368 = arith.constant 1368 : index
    %c0_86 = arith.constant 0 : index
    %175 = vector.load %arg2[%c1368, %c0_86] : memref<2280x128xf32, #tpu.memory_space<vmem>>, vector<7x4xf32>
    %c1376 = arith.constant 1376 : index
    %c0_87 = arith.constant 0 : index
    %176 = vector.load %arg2[%c1376, %c0_87] : memref<2280x128xf32, #tpu.memory_space<vmem>>, vector<1x1xf32>
    %cst_88 = arith.constant dense<0.000000e+00> : vector<7x128xf32>
    %177 = tpu.matmul %175, %174, %cst_88 {dimension_numbers = #tpu.dot_dimension_numbers<[1], [0], [0], [1], [0, 0, 1, 1], [], []>} : vector<7x4xf32>, vector<4x128xf32>, vector<7x128xf32> -> vector<7x128xf32>
    %c1384 = arith.constant 1384 : index
    %c0_89 = arith.constant 0 : index
    %178 = vector.load %arg2[%c1384, %c0_89] : memref<2280x128xf32, #tpu.memory_space<vmem>>, vector<128x128xf32>
    %179 = vector.extract_strided_slice %177 {offsets = [0, 0], sizes = [1, 128], strides = [1, 1]} : vector<7x128xf32> to vector<1x128xf32>
    %cst_90 = arith.constant dense<0.000000e+00> : vector<1x128xf32>
    %180 = tpu.matmul %179, %178, %cst_90 {dimension_numbers = #tpu.dot_dimension_numbers<[1], [0], [0], [1], [0, 0, 1, 1], [], []>} : vector<1x128xf32>, vector<128x128xf32>, vector<1x128xf32> -> vector<1x128xf32>
    %c1512 = arith.constant 1512 : index
    %c0_91 = arith.constant 0 : index
    %181 = vector.load %arg2[%c1512, %c0_91] : memref<2280x128xf32, #tpu.memory_space<vmem>>, vector<128x128xf32>
    %182 = vector.extract_strided_slice %177 {offsets = [1, 0], sizes = [1, 128], strides = [1, 1]} : vector<7x128xf32> to vector<1x128xf32>
    %cst_92 = arith.constant dense<0.000000e+00> : vector<1x128xf32>
    %183 = tpu.matmul %182, %181, %cst_92 {dimension_numbers = #tpu.dot_dimension_numbers<[1], [0], [0], [1], [0, 0, 1, 1], [], []>} : vector<1x128xf32>, vector<128x128xf32>, vector<1x128xf32> -> vector<1x128xf32>
    %184 = arith.addf %180, %183 : vector<1x128xf32>
    %c1640 = arith.constant 1640 : index
    %c0_93 = arith.constant 0 : index
    %185 = vector.load %arg2[%c1640, %c0_93] : memref<2280x128xf32, #tpu.memory_space<vmem>>, vector<128x128xf32>
    %186 = vector.extract_strided_slice %177 {offsets = [2, 0], sizes = [1, 128], strides = [1, 1]} : vector<7x128xf32> to vector<1x128xf32>
    %cst_94 = arith.constant dense<0.000000e+00> : vector<1x128xf32>
    %187 = tpu.matmul %186, %185, %cst_94 {dimension_numbers = #tpu.dot_dimension_numbers<[1], [0], [0], [1], [0, 0, 1, 1], [], []>} : vector<1x128xf32>, vector<128x128xf32>, vector<1x128xf32> -> vector<1x128xf32>
    %188 = arith.addf %184, %187 : vector<1x128xf32>
    %c1768 = arith.constant 1768 : index
    %c0_95 = arith.constant 0 : index
    %189 = vector.load %arg2[%c1768, %c0_95] : memref<2280x128xf32, #tpu.memory_space<vmem>>, vector<128x128xf32>
    %190 = vector.extract_strided_slice %177 {offsets = [3, 0], sizes = [1, 128], strides = [1, 1]} : vector<7x128xf32> to vector<1x128xf32>
    %cst_96 = arith.constant dense<0.000000e+00> : vector<1x128xf32>
    %191 = tpu.matmul %190, %189, %cst_96 {dimension_numbers = #tpu.dot_dimension_numbers<[1], [0], [0], [1], [0, 0, 1, 1], [], []>} : vector<1x128xf32>, vector<128x128xf32>, vector<1x128xf32> -> vector<1x128xf32>
    %192 = arith.addf %188, %191 : vector<1x128xf32>
    %c1896 = arith.constant 1896 : index
    %c0_97 = arith.constant 0 : index
    %193 = vector.load %arg2[%c1896, %c0_97] : memref<2280x128xf32, #tpu.memory_space<vmem>>, vector<128x128xf32>
    %194 = vector.extract_strided_slice %177 {offsets = [4, 0], sizes = [1, 128], strides = [1, 1]} : vector<7x128xf32> to vector<1x128xf32>
    %cst_98 = arith.constant dense<0.000000e+00> : vector<1x128xf32>
    %195 = tpu.matmul %194, %193, %cst_98 {dimension_numbers = #tpu.dot_dimension_numbers<[1], [0], [0], [1], [0, 0, 1, 1], [], []>} : vector<1x128xf32>, vector<128x128xf32>, vector<1x128xf32> -> vector<1x128xf32>
    %196 = arith.addf %192, %195 : vector<1x128xf32>
    %c2024 = arith.constant 2024 : index
    %c0_99 = arith.constant 0 : index
    %197 = vector.load %arg2[%c2024, %c0_99] : memref<2280x128xf32, #tpu.memory_space<vmem>>, vector<128x128xf32>
    %198 = vector.extract_strided_slice %177 {offsets = [5, 0], sizes = [1, 128], strides = [1, 1]} : vector<7x128xf32> to vector<1x128xf32>
    %cst_100 = arith.constant dense<0.000000e+00> : vector<1x128xf32>
    %199 = tpu.matmul %198, %197, %cst_100 {dimension_numbers = #tpu.dot_dimension_numbers<[1], [0], [0], [1], [0, 0, 1, 1], [], []>} : vector<1x128xf32>, vector<128x128xf32>, vector<1x128xf32> -> vector<1x128xf32>
    %200 = arith.addf %196, %199 : vector<1x128xf32>
    %c2152 = arith.constant 2152 : index
    %c0_101 = arith.constant 0 : index
    %201 = vector.load %arg2[%c2152, %c0_101] : memref<2280x128xf32, #tpu.memory_space<vmem>>, vector<128x128xf32>
    %202 = vector.extract_strided_slice %177 {offsets = [6, 0], sizes = [1, 128], strides = [1, 1]} : vector<7x128xf32> to vector<1x128xf32>
    %cst_102 = arith.constant dense<0.000000e+00> : vector<1x128xf32>
    %203 = tpu.matmul %202, %201, %cst_102 {dimension_numbers = #tpu.dot_dimension_numbers<[1], [0], [0], [1], [0, 0, 1, 1], [], []>} : vector<1x128xf32>, vector<128x128xf32>, vector<1x128xf32> -> vector<1x128xf32>
    %204 = arith.addf %200, %203 : vector<1x128xf32>
    %205 = vector.broadcast %176 : vector<1x1xf32> to vector<1x128xf32>
    %206 = arith.addf %204, %205 : vector<1x128xf32>
    %c0_103 = arith.constant 0 : index
    %c0_104 = arith.constant 0 : index
    %207 = vector.load %arg3[%c0_103, %c0_104] : memref<1x128xf32, #tpu.memory_space<vmem>>, vector<1x128xf32>
    tpu.vector_store %arg3[%c0_103, %c0_104], %206 {strides = array<i32>} : memref<1x128xf32, #tpu.memory_space<vmem>>, vector<1x128xf32>,
    return
  }
  func.func @transform_0(%arg0: i32) -> (i32, i32) {
    %c0_i32 = arith.constant 0 : i32
    %c0_i32_0 = arith.constant 0 : i32
    %c0_i32_1 = arith.constant 0 : i32
    return %c0_i32, %c0_i32_0 : i32, i32
  }
  func.func @transform_1(%arg0: i32) -> (i32, i32) {
    %c0_i32 = arith.constant 0 : i32
    %c0_i32_0 = arith.constant 0 : i32
    %c0_i32_1 = arith.constant 0 : i32
    return %c0_i32, %c0_i32_0 : i32, i32
  }
  func.func @transform_2(%arg0: i32) -> (i32, i32) {
    %c0_i32 = arith.constant 0 : i32
    %c0_i32_0 = arith.constant 0 : i32
    %c0_i32_1 = arith.constant 0 : i32
    return %c0_i32, %c0_i32_0 : i32, i32
  }
}

</mosaic_0001>

<llo_original>
// kernel: _lambda_.1
$region0: #{_lambda_.1}
  #allocation0 [shape = 'u32[]', space=smem, size = 0x4, offset = 0x4, fixed_abs, tag = 'smem constant byte address 0x4 - core index']
  #allocation1 [shape = 'u32[72,128]{1,0:T(1,128)}', space=vmem, size = 0x9000, scoped, tag = 'internal scratch']
  %s0 = inlined_call_operand.vmem [shape: f32[32,16], index: 0, kind: input, shape index: {}]
  %s1 = inlined_call_operand.hbm [shape: f32[2280,128], index: 1, kind: input, shape index: {}]
  %s2 = inlined_call_operand.vmem [shape: f32[1,128], index: 2, kind: output, shape index: {}]
  %s3 = sld [smem:[#allocation0]]
  $region22: #{_lambda_.1} parent=0
    _
  %s5 = ssub.s32 1, %s3
  %s6 = scalar_select 0, %s5, %s3
  $region1: #{_lambda_.1} parent=0
    #allocation2 [shape = 'u8[1167360]{0}', space=vmem, size = 0x11d000, scoped, tag = 'input window, operand 1, single buffered']
    #allocation3 [shape = 's32[1]{0}', space=sflag, size = 0x4, scoped, tag = 'scoped memory for _lambda_.1']
    %7 = vsyncpa [#allocation3], 0
    // Predicated region
    $region2: #{_lambda_.1} parent=1 // pred_check
      _
    $region3: #{_lambda_.1} parent=1 // pred_check_branch
      %9 = sbr.rel (0) target = $region5
    $region4: #{_lambda_.1} parent=1 // pred_region
      _
    $region5: #{_lambda_.1} parent=1 // pred_fallthru
      _
    // Predicated region
    $region6: #{_lambda_.1} parent=1 // pred_check
      _
    $region7: #{_lambda_.1} parent=1 // pred_check_branch
      %11 = sbr.rel (0) target = $region9
    $region8: #{_lambda_.1} parent=1 // pred_region
      %13 = vsyncadd [#allocation3], 0
      %s14 = sshll.u32 %s1, 4
      %s15 = int_to_ptr.hbm [resolvable:$true] %s14
      %s16 = sshll.u32 [#allocation2], 4
      %s17 = int_to_ptr.vmem [resolvable:$true] %s16
      %22 = dma.hbm_to_vmem [thread:$0]  %s15, 36480, %s17, [#allocation3], 128, 128, 8
    $region9: #{_lambda_.1} parent=1 // pred_fallthru
      _
    // Predicated region
    $region10: #{_lambda_.1} parent=1 // pred_check
      _
    $region11: #{_lambda_.1} parent=1 // pred_check_branch
      %24 = sbr.rel (0) target = $region13
    $region12: #{_lambda_.1} parent=1 // pred_region
      %26 = dma.done [#allocation3], 36480
    $region13: #{_lambda_.1} parent=1 // pred_fallthru
      _
    %v27 = vld [vmem:[%s0] sm:$0xff]
    %v28 = vld [vmem:[%s0 + $0x8] sm:$0xff]
    %v29 = vld [vmem:[%s0 + $0x10] sm:$0xff]
    %v30 = vld [vmem:[%s0 + $0x18] sm:$0xff]
    %v31 = vld [vmem:[#allocation2] sm:$0xff]
    %v32 = vld [vmem:[#allocation2 + $0x8] sm:$0xff]
    %v33 = vld [vmem:[#allocation2 + $0x10] sm:$0xff]
    %v34 = vld [vmem:[#allocation2 + $0x18] sm:$0xff]
    %v35 = vld [vmem:[#allocation2 + $0x20] sm:$0xff]
    %v36 = vld [vmem:[#allocation2 + $0x28] sm:$0xff]
    %v37 = vld [vmem:[#allocation2 + $0x30] sm:$0xff]
    %v38 = vld [vmem:[#allocation2 + $0x38] sm:$0xff]
    %v39 = vld [vmem:[#allocation2 + $0x40] sm:$0xff]
    %v40 = vld [vmem:[#allocation2 + $0x48] sm:$0xff]
    %v41 = vld [vmem:[#allocation2 + $0x50] sm:$0xff]
    %v42 = vld [vmem:[#allocation2 + $0x58] sm:$0xff]
    %v43 = vld [vmem:[#allocation2 + $0x60] sm:$0xff]
    %v44 = vld [vmem:[#allocation2 + $0x68] sm:$0xff]
    %v45 = vld [vmem:[#allocation2 + $0x70] sm:$0xff]
    %v46 = vld [vmem:[#allocation2 + $0x78] sm:$0xff]
    %vm47 = vcmask 261120
    %v49 = vsel %vm47, %v31, 0
    %v52 = vsel %vm47, %v32, 0
    %v55 = vsel %vm47, %v33, 0
    %v58 = vsel %vm47, %v34, 0
    %v61 = vsel %vm47, %v35, 0
    %v64 = vsel %vm47, %v36, 0
    %v67 = vsel %vm47, %v37, 0
    %v70 = vsel %vm47, %v38, 0
    %v73 = vsel %vm47, %v39, 0
    %v76 = vsel %vm47, %v40, 0
    %v79 = vsel %vm47, %v41, 0
    %v82 = vsel %vm47, %v42, 0
    %v85 = vsel %vm47, %v43, 0
    %v88 = vsel %vm47, %v44, 0
    %90 = vmatpush.msra.mxu0 0.0
    %91 = vmatpush.msra.mxu0 0.0
    %92 = vmatpush.msra.mxu0 0.0
    %93 = vmatpush.msra.mxu0 0.0
    %94 = vmatpush.msra.mxu0 0.0
    %95 = vmatpush.msra.mxu0 0.0
    %96 = vmatpush.msra.mxu0 0.0
    %97 = vmatpush.msra.mxu0 0.0
    %98 = vmatpush.msra.mxu0 0.0
    %99 = vmatpush.msra.mxu0 0.0
    %100 = vmatpush.msra.mxu0 0.0
    %101 = vmatpush.msra.mxu0 0.0
    %102 = vmatpush.msra.mxu0 %v30
    %103 = vmatpush.msra.mxu0 %v29
    %104 = vmatpush.msra.mxu0 %v28
    %105 = vmatpush.msra.mxu0 %v27
    %106 = vmatmul.f32.gmra.mxu0 %v49
    %v107 = vpop.f32.mrf.mxu0
    %v108 = vadd.f32 0.0, %v107
    %109 = vmatmul.f32.gmra.mxu0 %v52
    %v110 = vpop.f32.mrf.mxu0
    %v111 = vadd.f32 0.0, %v110
    %112 = vmatmul.f32.gmra.mxu0 %v55
    %v113 = vpop.f32.mrf.mxu0
    %v114 = vadd.f32 0.0, %v113
    %115 = vmatmul.f32.gmra.mxu0 %v58
    %v116 = vpop.f32.mrf.mxu0
    %v117 = vadd.f32 0.0, %v116
    %118 = vmatmul.f32.gmra.mxu0 %v61
    %v119 = vpop.f32.mrf.mxu0
    %v120 = vadd.f32 0.0, %v119
    %121 = vmatmul.f32.gmra.mxu0 %v64
    %v122 = vpop.f32.mrf.mxu0
    %v123 = vadd.f32 0.0, %v122
    %124 = vmatmul.f32.gmra.mxu0 %v67
    %v125 = vpop.f32.mrf.mxu0
    %v126 = vadd.f32 0.0, %v125
    %127 = vmatmul.f32.gmra.mxu0 %v70
    %v128 = vpop.f32.mrf.mxu0
    %v129 = vadd.f32 0.0, %v128
    %130 = vmatmul.f32.gmra.mxu0 %v73
    %v131 = vpop.f32.mrf.mxu0
    %v132 = vadd.f32 0.0, %v131
    %133 = vmatmul.f32.gmra.mxu0 %v76
    %v134 = vpop.f32.mrf.mxu0
    %v135 = vadd.f32 0.0, %v134
    %136 = vmatmul.f32.gmra.mxu0 %v79
    %v137 = vpop.f32.mrf.mxu0
    %v138 = vadd.f32 0.0, %v137
    %139 = vmatmul.f32.gmra.mxu0 %v82
    %v140 = vpop.f32.mrf.mxu0
    %v141 = vadd.f32 0.0, %v140
    %142 = vmatmul.f32.gmra.mxu0 %v85
    %v143 = vpop.f32.mrf.mxu0
    %v144 = vadd.f32 0.0, %v143
    %145 = vmatmul.f32.gmra.mxu0 %v88
    %v146 = vpop.f32.mrf.mxu0
    %v147 = vadd.f32 0.0, %v146
    %148 = vdwg.mxu0
    %v149 = vld [vmem:[#allocation2 + $0x80] sm:$0xff]
    %v150 = vld [vmem:[#allocation2 + $0x88] sm:$0xff]
    %v151 = vld [vmem:[#allocation2 + $0x90] sm:$0xff]
    %v152 = vld [vmem:[#allocation2 + $0x98] sm:$0xff]
    %vm153 = vcmask 130048
    %v155 = vsel %vm153, %v114, 0
    %v158 = vsel %vm153, %v117, 0
    %160 = vmatpush.msra.mxu0 0.0
    %161 = vmatpush.msra.mxu0 0.0
    %162 = vmatpush.msra.mxu0 0.0
    %163 = vmatpush.msra.mxu0 0.0
    %164 = vmatpush.msra.mxu0 0.0
    %165 = vmatpush.msra.mxu0 0.0
    %166 = vmatpush.msra.mxu0 0.0
    %167 = vmatpush.msra.mxu0 0.0
    %168 = vmatpush.msra.mxu0 0.0
    %169 = vmatpush.msra.mxu0 0.0
    %170 = vmatpush.msra.mxu0 0.0
    %171 = vmatpush.msra.mxu0 0.0
    %172 = vmatpush.msra.mxu0 0.0
    %173 = vmatpush.msra.mxu0 0.0
    %174 = vmatpush.msra.mxu0 %v152
    %175 = vmatpush.msra.mxu0 %v151
    %176 = vmatmul.f32.gmra.mxu0 %v155
    %v177 = vpop.f32.mrf.mxu0
    %v178 = vadd.f32 0.0, %v177
    %179 = vmatmul.f32.gmra.mxu0 %v158
    %v180 = vpop.f32.mrf.mxu0
    %v181 = vadd.f32 0.0, %v180
    %182 = vdwg.mxu0
    %v184 = vsel %vm153, %v108, 0
    %v187 = vsel %vm153, %v111, 0
    %189 = vmatpush.msra.mxu0 0.0
    %190 = vmatpush.msra.mxu0 0.0
    %191 = vmatpush.msra.mxu0 0.0
    %192 = vmatpush.msra.mxu0 0.0
    %193 = vmatpush.msra.mxu0 0.0
    %194 = vmatpush.msra.mxu0 0.0
    %195 = vmatpush.msra.mxu0 0.0
    %196 = vmatpush.msra.mxu0 0.0
    %197 = vmatpush.msra.mxu0 0.0
    %198 = vmatpush.msra.mxu0 0.0
    %199 = vmatpush.msra.mxu0 0.0
    %200 = vmatpush.msra.mxu0 0.0
    %201 = vmatpush.msra.mxu0 0.0
    %202 = vmatpush.msra.mxu0 0.0
    %203 = vmatpush.msra.mxu0 %v150
    %204 = vmatpush.msra.mxu0 %v149
    %205 = vmatmul.f32.gmra.mxu0 %v184
    %v206 = vpop.f32.mrf.mxu0
    %v207 = vadd.f32 %v178, %v206
    %208 = vmatmul.f32.gmra.mxu0 %v187
    %v209 = vpop.f32.mrf.mxu0
    %v210 = vadd.f32 %v181, %v209
    %211 = vdwg.mxu0
    %v212 = vld [vmem:[#allocation2 + $0xa0] sm:$0xff]
    %v213 = vld [vmem:[#allocation2 + $0xa8] sm:$0xff]
    %v215 = vsel %vm153, %v120, 0
    %v218 = vsel %vm153, %v123, 0
    %220 = vmatpush.msra.mxu0 0.0
    %221 = vmatpush.msra.mxu0 0.0
    %222 = vmatpush.msra.mxu0 0.0
    %223 = vmatpush.msra.mxu0 0.0
    %224 = vmatpush.msra.mxu0 0.0
    %225 = vmatpush.msra.mxu0 0.0
    %226 = vmatpush.msra.mxu0 0.0
    %227 = vmatpush.msra.mxu0 0.0
    %228 = vmatpush.msra.mxu0 0.0
    %229 = vmatpush.msra.mxu0 0.0
    %230 = vmatpush.msra.mxu0 0.0
    %231 = vmatpush.msra.mxu0 0.0
    %232 = vmatpush.msra.mxu0 0.0
    %233 = vmatpush.msra.mxu0 0.0
    %234 = vmatpush.msra.mxu0 %v213
    %235 = vmatpush.msra.mxu0 %v212
    %236 = vmatmul.f32.gmra.mxu0 %v215
    %v237 = vpop.f32.mrf.mxu0
    %v238 = vadd.f32 0.0, %v237
    %239 = vmatmul.f32.gmra.mxu0 %v218
    %v240 = vpop.f32.mrf.mxu0
    %v241 = vadd.f32 0.0, %v240
    %242 = vdwg.mxu0
    %v243 = vadd.f32 %v207, %v238
    %v244 = vadd.f32 %v210, %v241
    %v245 = vld [vmem:[#allocation2 + $0xb0] sm:$0xff]
    %v246 = vld [vmem:[#allocation2 + $0xb8] sm:$0xff]
    %v248 = vsel %vm153, %v126, 0
    %v251 = vsel %vm153, %v129, 0
    %253 = vmatpush.msra.mxu0 0.0
    %254 = vmatpush.msra.mxu0 0.0
    %255 = vmatpush.msra.mxu0 0.0
    %256 = vmatpush.msra.mxu0 0.0
    %257 = vmatpush.msra.mxu0 0.0
    %258 = vmatpush.msra.mxu0 0.0
    %259 = vmatpush.msra.mxu0 0.0
    %260 = vmatpush.msra.mxu0 0.0
    %261 = vmatpush.msra.mxu0 0.0
    %262 = vmatpush.msra.mxu0 0.0
    %263 = vmatpush.msra.mxu0 0.0
    %264 = vmatpush.msra.mxu0 0.0
    %265 = vmatpush.msra.mxu0 0.0
    %266 = vmatpush.msra.mxu0 0.0
    %267 = vmatpush.msra.mxu0 %v246
    %268 = vmatpush.msra.mxu0 %v245
    %269 = vmatmul.f32.gmra.mxu0 %v248
    %v270 = vpop.f32.mrf.mxu0
    %v271 = vadd.f32 0.0, %v270
    %272 = vmatmul.f32.gmra.mxu0 %v251
    %v273 = vpop.f32.mrf.mxu0
    %v274 = vadd.f32 0.0, %v273
    %275 = vdwg.mxu0
    %v276 = vadd.f32 %v243, %v271
    %v277 = vadd.f32 %v244, %v274
    %v278 = vld [vmem:[#allocation2 + $0xc0] sm:$0xff]
    %v279 = vld [vmem:[#allocation2 + $0xc8] sm:$0xff]
    %v281 = vsel %vm153, %v132, 0
    %v284 = vsel %vm153, %v135, 0
    %286 = vmatpush.msra.mxu0 0.0
    %287 = vmatpush.msra.mxu0 0.0
    %288 = vmatpush.msra.mxu0 0.0
    %289 = vmatpush.msra.mxu0 0.0
    %290 = vmatpush.msra.mxu0 0.0
    %291 = vmatpush.msra.mxu0 0.0
    %292 = vmatpush.msra.mxu0 0.0
    %293 = vmatpush.msra.mxu0 0.0
    %294 = vmatpush.msra.mxu0 0.0
    %295 = vmatpush.msra.mxu0 0.0
    %296 = vmatpush.msra.mxu0 0.0
    %297 = vmatpush.msra.mxu0 0.0
    %298 = vmatpush.msra.mxu0 0.0
    %299 = vmatpush.msra.mxu0 0.0
    %300 = vmatpush.msra.mxu0 %v279
    %301 = vmatpush.msra.mxu0 %v278
    %302 = vmatmul.f32.gmra.mxu0 %v281
    %v303 = vpop.f32.mrf.mxu0
    %v304 = vadd.f32 0.0, %v303
    %305 = vmatmul.f32.gmra.mxu0 %v284
    %v306 = vpop.f32.mrf.mxu0
    %v307 = vadd.f32 0.0, %v306
    %308 = vdwg.mxu0
    %v309 = vadd.f32 %v276, %v304
    %v310 = vadd.f32 %v277, %v307
    %v311 = vld [vmem:[#allocation2 + $0xd0] sm:$0xff]
    %v312 = vld [vmem:[#allocation2 + $0xd8] sm:$0xff]
    %v314 = vsel %vm153, %v138, 0
    %v317 = vsel %vm153, %v141, 0
    %319 = vmatpush.msra.mxu0 0.0
    %320 = vmatpush.msra.mxu0 0.0
    %321 = vmatpush.msra.mxu0 0.0
    %322 = vmatpush.msra.mxu0 0.0
    %323 = vmatpush.msra.mxu0 0.0
    %324 = vmatpush.msra.mxu0 0.0
    %325 = vmatpush.msra.mxu0 0.0
    %326 = vmatpush.msra.mxu0 0.0
    %327 = vmatpush.msra.mxu0 0.0
    %328 = vmatpush.msra.mxu0 0.0
    %329 = vmatpush.msra.mxu0 0.0
    %330 = vmatpush.msra.mxu0 0.0
    %331 = vmatpush.msra.mxu0 0.0
    %332 = vmatpush.msra.mxu0 0.0
    %333 = vmatpush.msra.mxu0 %v312
    %334 = vmatpush.msra.mxu0 %v311
    %335 = vmatmul.f32.gmra.mxu0 %v314
    %v336 = vpop.f32.mrf.mxu0
    %v337 = vadd.f32 0.0, %v336
    %338 = vmatmul.f32.gmra.mxu0 %v317
    %v339 = vpop.f32.mrf.mxu0
    %v340 = vadd.f32 0.0, %v339
    %341 = vdwg.mxu0
    %v342 = vadd.f32 %v309, %v337
    %v343 = vadd.f32 %v310, %v340
    %v344 = vld [vmem:[#allocation2 + $0xe0] sm:$0xff]
    %v345 = vld [vmem:[#allocation2 + $0xe8] sm:$0xff]
    %v347 = vsel %vm153, %v144, 0
    %v350 = vsel %vm153, %v147, 0
    %352 = vmatpush.msra.mxu0 0.0
    %353 = vmatpush.msra.mxu0 0.0
    %354 = vmatpush.msra.mxu0 0.0
    %355 = vmatpush.msra.mxu0 0.0
    %356 = vmatpush.msra.mxu0 0.0
    %357 = vmatpush.msra.mxu0 0.0
    %358 = vmatpush.msra.mxu0 0.0
    %359 = vmatpush.msra.mxu0 0.0
    %360 = vmatpush.msra.mxu0 0.0
    %361 = vmatpush.msra.mxu0 0.0
    %362 = vmatpush.msra.mxu0 0.0
    %363 = vmatpush.msra.mxu0 0.0
    %364 = vmatpush.msra.mxu0 0.0
    %365 = vmatpush.msra.mxu0 0.0
    %366 = vmatpush.msra.mxu0 %v345
    %367 = vmatpush.msra.mxu0 %v344
    %368 = vmatmul.f32.gmra.mxu0 %v347
    %v369 = vpop.f32.mrf.mxu0
    %v370 = vadd.f32 0.0, %v369
    %371 = vmatmul.f32.gmra.mxu0 %v350
    %v372 = vpop.f32.mrf.mxu0
    %v373 = vadd.f32 0.0, %v372
    %374 = vdwg.mxu0
    %v375 = vadd.f32 %v342, %v370
    %v376 = vadd.f32 %v343, %v373
    %378 = vset.pattern.permute.xlu0 0
    %379 = vperm.xlu0 %378, %v45
    %v380 = vpop.permute.xlu0 %379
    %383 = vset.pattern.permute.xlu0 0
    %384 = vperm.xlu0 %383, %v46
    %v385 = vpop.permute.xlu0 %384
    %v387 = vadd.f32 %v375, %v380
    %v388 = vadd.f32 %v376, %v385
    %vm389 = vcmp.gt.f32.partialorder %v387, 0.0
    %vm390 = vcmp.gt.f32.partialorder %v388, 0.0
    %v391 = vmul.f32 %v387, 1.442695
    %v392 = vpow.pop %v391
    %v393 = vmul.f32 %v388, 1.442695
    %v394 = vpow.pop %v393
    %v395 = vsub.f32 %v392, 1.0
    %v396 = vsub.f32 %v394, 1.0
    %v397 = vsel %vm389, %v387, %v395
    %v398 = vsel %vm390, %v388, %v396
    %v399 = vld [vmem:[#allocation2 + $0xf0] sm:$0xff]
    %v400 = vld [vmem:[#allocation2 + $0xf8] sm:$0xff]
    %v401 = vld [vmem:[#allocation2 + $0x100] sm:$0xff]
    %v402 = vld [vmem:[#allocation2 + $0x108] sm:$0xff]
    %v403 = vld [vmem:[#allocation2 + $0x110] sm:$0xff]
    %v404 = vld [vmem:[#allocation2 + $0x118] sm:$0xff]
    %v405 = vld [vmem:[#allocation2 + $0x120] sm:$0xff]
    %v406 = vld [vmem:[#allocation2 + $0x128] sm:$0xff]
    %v407 = vld [vmem:[#allocation2 + $0x130] sm:$0xff]
    %v409 = vsel %vm153, %v399, 0
    %v412 = vsel %vm153, %v400, 0
    %v415 = vsel %vm153, %v401, 0
    %v418 = vsel %vm153, %v402, 0
    %v421 = vsel %vm153, %v403, 0
    %v424 = vsel %vm153, %v404, 0
    %v427 = vsel %vm153, %v405, 0
    %v430 = vsel %vm153, %v406, 0
    %432 = vmatpush.msra.mxu0 0.0
    %433 = vmatpush.msra.mxu0 0.0
    %434 = vmatpush.msra.mxu0 0.0
    %435 = vmatpush.msra.mxu0 0.0
    %436 = vmatpush.msra.mxu0 0.0
    %437 = vmatpush.msra.mxu0 0.0
    %438 = vmatpush.msra.mxu0 0.0
    %439 = vmatpush.msra.mxu0 0.0
    %440 = vmatpush.msra.mxu0 0.0
    %441 = vmatpush.msra.mxu0 0.0
    %442 = vmatpush.msra.mxu0 0.0
    %443 = vmatpush.msra.mxu0 0.0
    %444 = vmatpush.msra.mxu0 0.0
    %445 = vmatpush.msra.mxu0 0.0
    %446 = vmatpush.msra.mxu0 %v398
    %447 = vmatpush.msra.mxu0 %v397
    %448 = vmatmul.f32.gmra.mxu0 %v409
    %v449 = vpop.f32.mrf.mxu0
    %v450 = vadd.f32 0.0, %v449
    %451 = vmatmul.f32.gmra.mxu0 %v412
    %v452 = vpop.f32.mrf.mxu0
    %v453 = vadd.f32 0.0, %v452
    %454 = vmatmul.f32.gmra.mxu0 %v415
    %v455 = vpop.f32.mrf.mxu0
    %v456 = vadd.f32 0.0, %v455
    %457 = vmatmul.f32.gmra.mxu0 %v418
    %v458 = vpop.f32.mrf.mxu0
    %v459 = vadd.f32 0.0, %v458
    %460 = vmatmul.f32.gmra.mxu0 %v421
    %v461 = vpop.f32.mrf.mxu0
    %v462 = vadd.f32 0.0, %v461
    %463 = vmatmul.f32.gmra.mxu0 %v424
    %v464 = vpop.f32.mrf.mxu0
    %v465 = vadd.f32 0.0, %v464
    %466 = vmatmul.f32.gmra.mxu0 %v427
    %v467 = vpop.f32.mrf.mxu0
    %v468 = vadd.f32 0.0, %v467
    %469 = vmatmul.f32.gmra.mxu0 %v430
    %v470 = vpop.f32.mrf.mxu0
    %v471 = vadd.f32 0.0, %v470
    %472 = vdwg.mxu0
    %v473 = vld [vmem:[#allocation2 + $0x138] sm:$0xff]
    %v474 = vld [vmem:[#allocation2 + $0x140] sm:$0xff]
    %v475 = vld [vmem:[#allocation2 + $0x148] sm:$0xff]
    %v476 = vld [vmem:[#allocation2 + $0x150] sm:$0xff]
    %v478 = vsel %vm153, %v453, 0
    %480 = vmatpush.msra.mxu0 0.0
    %481 = vmatpush.msra.mxu0 0.0
    %482 = vmatpush.msra.mxu0 0.0
    %483 = vmatpush.msra.mxu0 0.0
    %484 = vmatpush.msra.mxu0 0.0
    %485 = vmatpush.msra.mxu0 0.0
    %486 = vmatpush.msra.mxu0 0.0
    %487 = vmatpush.msra.mxu0 0.0
    %488 = vmatpush.msra.mxu0 0.0
    %489 = vmatpush.msra.mxu0 0.0
    %490 = vmatpush.msra.mxu0 0.0
    %491 = vmatpush.msra.mxu0 0.0
    %492 = vmatpush.msra.mxu0 0.0
    %493 = vmatpush.msra.mxu0 0.0
    %494 = vmatpush.msra.mxu0 %v476
    %495 = vmatpush.msra.mxu0 %v475
    %496 = vmatmul.f32.gmra.mxu0 %v478
    %v497 = vpop.f32.mrf.mxu0
    %v498 = vadd.f32 0.0, %v497
    %499 = vdwg.mxu0
    %v501 = vsel %vm153, %v450, 0
    %503 = vmatpush.msra.mxu0 0.0
    %504 = vmatpush.msra.mxu0 0.0
    %505 = vmatpush.msra.mxu0 0.0
    %506 = vmatpush.msra.mxu0 0.0
    %507 = vmatpush.msra.mxu0 0.0
    %508 = vmatpush.msra.mxu0 0.0
    %509 = vmatpush.msra.mxu0 0.0
    %510 = vmatpush.msra.mxu0 0.0
    %511 = vmatpush.msra.mxu0 0.0
    %512 = vmatpush.msra.mxu0 0.0
    %513 = vmatpush.msra.mxu0 0.0
    %514 = vmatpush.msra.mxu0 0.0
    %515 = vmatpush.msra.mxu0 0.0
    %516 = vmatpush.msra.mxu0 0.0
    %517 = vmatpush.msra.mxu0 %v474
    %518 = vmatpush.msra.mxu0 %v473
    %519 = vmatmul.f32.gmra.mxu0 %v501
    %v520 = vpop.f32.mrf.mxu0
    %v521 = vadd.f32 %v498, %v520
    %522 = vdwg.mxu0
    %v523 = vld [vmem:[#allocation2 + $0x158] sm:$0xff]
    %v524 = vld [vmem:[#allocation2 + $0x160] sm:$0xff]
    %v526 = vsel %vm153, %v456, 0
    %528 = vmatpush.msra.mxu0 0.0
    %529 = vmatpush.msra.mxu0 0.0
    %530 = vmatpush.msra.mxu0 0.0
    %531 = vmatpush.msra.mxu0 0.0
    %532 = vmatpush.msra.mxu0 0.0
    %533 = vmatpush.msra.mxu0 0.0
    %534 = vmatpush.msra.mxu0 0.0
    %535 = vmatpush.msra.mxu0 0.0
    %536 = vmatpush.msra.mxu0 0.0
    %537 = vmatpush.msra.mxu0 0.0
    %538 = vmatpush.msra.mxu0 0.0
    %539 = vmatpush.msra.mxu0 0.0
    %540 = vmatpush.msra.mxu0 0.0
    %541 = vmatpush.msra.mxu0 0.0
    %542 = vmatpush.msra.mxu0 %v524
    %543 = vmatpush.msra.mxu0 %v523
    %544 = vmatmul.f32.gmra.mxu0 %v526
    %v545 = vpop.f32.mrf.mxu0
    %v546 = vadd.f32 0.0, %v545
    %547 = vdwg.mxu0
    %v548 = vadd.f32 %v521, %v546
    %v549 = vld [vmem:[#allocation2 + $0x168] sm:$0xff]
    %v550 = vld [vmem:[#allocation2 + $0x170] sm:$0xff]
    %v552 = vsel %vm153, %v459, 0
    %554 = vmatpush.msra.mxu0 0.0
    %555 = vmatpush.msra.mxu0 0.0
    %556 = vmatpush.msra.mxu0 0.0
    %557 = vmatpush.msra.mxu0 0.0
    %558 = vmatpush.msra.mxu0 0.0
    %559 = vmatpush.msra.mxu0 0.0
    %560 = vmatpush.msra.mxu0 0.0
    %561 = vmatpush.msra.mxu0 0.0
    %562 = vmatpush.msra.mxu0 0.0
    %563 = vmatpush.msra.mxu0 0.0
    %564 = vmatpush.msra.mxu0 0.0
    %565 = vmatpush.msra.mxu0 0.0
    %566 = vmatpush.msra.mxu0 0.0
    %567 = vmatpush.msra.mxu0 0.0
    %568 = vmatpush.msra.mxu0 %v550
    %569 = vmatpush.msra.mxu0 %v549
    %570 = vmatmul.f32.gmra.mxu0 %v552
    %v571 = vpop.f32.mrf.mxu0
    %v572 = vadd.f32 0.0, %v571
    %573 = vdwg.mxu0
    %v574 = vadd.f32 %v548, %v572
    %v575 = vld [vmem:[#allocation2 + $0x178] sm:$0xff]
    %v576 = vld [vmem:[#allocation2 + $0x180] sm:$0xff]
    %v578 = vsel %vm153, %v462, 0
    %580 = vmatpush.msra.mxu0 0.0
    %581 = vmatpush.msra.mxu0 0.0
    %582 = vmatpush.msra.mxu0 0.0
    %583 = vmatpush.msra.mxu0 0.0
    %584 = vmatpush.msra.mxu0 0.0
    %585 = vmatpush.msra.mxu0 0.0
    %586 = vmatpush.msra.mxu0 0.0
    %587 = vmatpush.msra.mxu0 0.0
    %588 = vmatpush.msra.mxu0 0.0
    %589 = vmatpush.msra.mxu0 0.0
    %590 = vmatpush.msra.mxu0 0.0
    %591 = vmatpush.msra.mxu0 0.0
    %592 = vmatpush.msra.mxu0 0.0
    %593 = vmatpush.msra.mxu0 0.0
    %594 = vmatpush.msra.mxu0 %v576
    %595 = vmatpush.msra.mxu0 %v575
    %596 = vmatmul.f32.gmra.mxu0 %v578
    %v597 = vpop.f32.mrf.mxu0
    %v598 = vadd.f32 0.0, %v597
    %599 = vdwg.mxu0
    %v600 = vadd.f32 %v574, %v598
    %v601 = vld [vmem:[#allocation2 + $0x188] sm:$0xff]
    %v602 = vld [vmem:[#allocation2 + $0x190] sm:$0xff]
    %v604 = vsel %vm153, %v465, 0
    %606 = vmatpush.msra.mxu0 0.0
    %607 = vmatpush.msra.mxu0 0.0
    %608 = vmatpush.msra.mxu0 0.0
    %609 = vmatpush.msra.mxu0 0.0
    %610 = vmatpush.msra.mxu0 0.0
    %611 = vmatpush.msra.mxu0 0.0
    %612 = vmatpush.msra.mxu0 0.0
    %613 = vmatpush.msra.mxu0 0.0
    %614 = vmatpush.msra.mxu0 0.0
    %615 = vmatpush.msra.mxu0 0.0
    %616 = vmatpush.msra.mxu0 0.0
    %617 = vmatpush.msra.mxu0 0.0
    %618 = vmatpush.msra.mxu0 0.0
    %619 = vmatpush.msra.mxu0 0.0
    %620 = vmatpush.msra.mxu0 %v602
    %621 = vmatpush.msra.mxu0 %v601
    %622 = vmatmul.f32.gmra.mxu0 %v604
    %v623 = vpop.f32.mrf.mxu0
    %v624 = vadd.f32 0.0, %v623
    %625 = vdwg.mxu0
    %v626 = vadd.f32 %v600, %v624
    %v627 = vld [vmem:[#allocation2 + $0x198] sm:$0xff]
    %v628 = vld [vmem:[#allocation2 + $0x1a0] sm:$0xff]
    %v630 = vsel %vm153, %v468, 0
    %632 = vmatpush.msra.mxu0 0.0
    %633 = vmatpush.msra.mxu0 0.0
    %634 = vmatpush.msra.mxu0 0.0
    %635 = vmatpush.msra.mxu0 0.0
    %636 = vmatpush.msra.mxu0 0.0
    %637 = vmatpush.msra.mxu0 0.0
    %638 = vmatpush.msra.mxu0 0.0
    %639 = vmatpush.msra.mxu0 0.0
    %640 = vmatpush.msra.mxu0 0.0
    %641 = vmatpush.msra.mxu0 0.0
    %642 = vmatpush.msra.mxu0 0.0
    %643 = vmatpush.msra.mxu0 0.0
    %644 = vmatpush.msra.mxu0 0.0
    %645 = vmatpush.msra.mxu0 0.0
    %646 = vmatpush.msra.mxu0 %v628
    %647 = vmatpush.msra.mxu0 %v627
    %648 = vmatmul.f32.gmra.mxu0 %v630
    %v649 = vpop.f32.mrf.mxu0
    %v650 = vadd.f32 0.0, %v649
    %651 = vdwg.mxu0
    %v652 = vadd.f32 %v626, %v650
    %v653 = vld [vmem:[#allocation2 + $0x1a8] sm:$0xff]
    %v654 = vld [vmem:[#allocation2 + $0x1b0] sm:$0xff]
    %v656 = vsel %vm153, %v471, 0
    %658 = vmatpush.msra.mxu0 0.0
    %659 = vmatpush.msra.mxu0 0.0
    %660 = vmatpush.msra.mxu0 0.0
    %661 = vmatpush.msra.mxu0 0.0
    %662 = vmatpush.msra.mxu0 0.0
    %663 = vmatpush.msra.mxu0 0.0
    %664 = vmatpush.msra.mxu0 0.0
    %665 = vmatpush.msra.mxu0 0.0
    %666 = vmatpush.msra.mxu0 0.0
    %667 = vmatpush.msra.mxu0 0.0
    %668 = vmatpush.msra.mxu0 0.0
    %669 = vmatpush.msra.mxu0 0.0
    %670 = vmatpush.msra.mxu0 0.0
    %671 = vmatpush.msra.mxu0 0.0
    %672 = vmatpush.msra.mxu0 %v654
    %673 = vmatpush.msra.mxu0 %v653
    %674 = vmatmul.f32.gmra.mxu0 %v656
    %v675 = vpop.f32.mrf.mxu0
    %v676 = vadd.f32 0.0, %v675
    %677 = vdwg.mxu0
    %v678 = vadd.f32 %v652, %v676
    %680 = vset.pattern.permute.xlu0 0
    %681 = vperm.xlu0 %680, %v407
    %v682 = vpop.permute.xlu0 %681
    %v684 = vadd.f32 %v678, %v682
    %vm685 = vcmp.gt.f32.partialorder %v684, 0.0
    %v686 = vmul.f32 %v684, 1.442695
    %v687 = vpow.pop %v686
    %v688 = vsub.f32 %v687, 1.0
    %v689 = vsel %vm685, %v684, %v688
    %v690 = vld [vmem:[#allocation2 + $0x1b8] sm:$0xff]
    %v691 = vld [vmem:[#allocation2 + $0x1c0] sm:$0xf]
    %v692 = vld [vmem:[#allocation2 + $0x1c8] sm:$0xf]
    %vm693 = vcmask 64512
    %v695 = vsel %vm693, %v690, 0
    %v698 = vsel %vm693, %v691, 0
    %700 = vmatpush.msra.mxu0 0.0
    %701 = vmatpush.msra.mxu0 0.0
    %702 = vmatpush.msra.mxu0 0.0
    %703 = vmatpush.msra.mxu0 0.0
    %704 = vmatpush.msra.mxu0 0.0
    %705 = vmatpush.msra.mxu0 0.0
    %706 = vmatpush.msra.mxu0 0.0
    %707 = vmatpush.msra.mxu0 0.0
    %708 = vmatpush.msra.mxu0 0.0
    %709 = vmatpush.msra.mxu0 0.0
    %710 = vmatpush.msra.mxu0 0.0
    %711 = vmatpush.msra.mxu0 0.0
    %712 = vmatpush.msra.mxu0 0.0
    %713 = vmatpush.msra.mxu0 0.0
    %714 = vmatpush.msra.mxu0 0.0
    %715 = vmatpush.msra.mxu0 %v689
    %716 = vmatmul.f32.gmra.mxu0 %v695
    %v717 = vpop.f32.mrf.mxu0
    %v718 = vadd.f32 0.0, %v717
    %719 = vmatmul.f32.gmra.mxu0 %v698
    %v720 = vpop.f32.mrf.mxu0
    %v721 = vadd.f32 0.0, %v720
    %722 = vdwg.mxu0
    %v723 = vld [vmem:[#allocation2 + $0x1d0] sm:$0xff]
    %v724 = vld [vmem:[#allocation2 + $0x1d8] sm:$0xff]
    %v725 = vld [vmem:[#allocation2 + $0x1e0] sm:$0xff]
    %v726 = vld [vmem:[#allocation2 + $0x1e8] sm:$0xff]
    %v727 = vld [vmem:[#allocation2 + $0x1f0] sm:$0xff]
    %v728 = vld [vmem:[#allocation2 + $0x1f8] sm:$0xff]
    %v729 = vld [vmem:[#allocation2 + $0x200] sm:$0xff]
    %v730 = vld [vmem:[#allocation2 + $0x208] sm:$0xff]
    %v731 = vld [vmem:[#allocation2 + $0x210] sm:$0xff]
    %v732 = vld [vmem:[#allocation2 + $0x218] sm:$0xff]
    %v733 = vld [vmem:[#allocation2 + $0x220] sm:$0xff]
    %v734 = vld [vmem:[#allocation2 + $0x228] sm:$0xff]
    %v735 = vld [vmem:[#allocation2 + $0x230] sm:$0xff]
    %v736 = vld [vmem:[#allocation2 + $0x238] sm:$0xff]
    %v737 = vld [vmem:[#allocation2 + $0x240] sm:$0xff]
    %v738 = vld [vmem:[#allocation2 + $0x248] sm:$0xff]
    %v740 = vrot.slane %v718, 4
    %vm741 = vcmask 523264
    %v742 = vsel %vm741, %v740, 0
    %744 = vmatpush.msra.mxu0 0.0
    %745 = vmatpush.msra.mxu0 0.0
    %746 = vmatpush.msra.mxu0 0.0
    %747 = vmatpush.msra.mxu0 0.0
    %748 = vmatpush.msra.mxu0 0.0
    %749 = vmatpush.msra.mxu0 0.0
    %750 = vmatpush.msra.mxu0 0.0
    %751 = vmatpush.msra.mxu0 0.0
    %752 = vmatpush.msra.mxu0 %v738
    %753 = vmatpush.msra.mxu0 %v737
    %754 = vmatpush.msra.mxu0 %v736
    %755 = vmatpush.msra.mxu0 %v735
    %756 = vmatpush.msra.mxu0 %v734
    %757 = vmatpush.msra.mxu0 %v733
    %758 = vmatpush.msra.mxu0 %v732
    %759 = vmatpush.msra.mxu0 %v731
    %760 = vmatmul.f32.gmra.mxu0 %v742
    %v761 = vpop.f32.mrf.mxu0
    %v762 = vadd.f32 0.0, %v761
    %763 = vdwg.mxu0
    %v764 = vsel %vm741, %v718, 0
    %766 = vmatpush.msra.mxu0 0.0
    %767 = vmatpush.msra.mxu0 0.0
    %768 = vmatpush.msra.mxu0 0.0
    %769 = vmatpush.msra.mxu0 0.0
    %770 = vmatpush.msra.mxu0 0.0
    %771 = vmatpush.msra.mxu0 0.0
    %772 = vmatpush.msra.mxu0 0.0
    %773 = vmatpush.msra.mxu0 0.0
    %774 = vmatpush.msra.mxu0 %v730
    %775 = vmatpush.msra.mxu0 %v729
    %776 = vmatpush.msra.mxu0 %v728
    %777 = vmatpush.msra.mxu0 %v727
    %778 = vmatpush.msra.mxu0 %v726
    %779 = vmatpush.msra.mxu0 %v725
    %780 = vmatpush.msra.mxu0 %v724
    %781 = vmatpush.msra.mxu0 %v723
    %782 = vmatmul.f32.gmra.mxu0 %v764
    %v783 = vpop.f32.mrf.mxu0
    %v784 = vadd.f32 %v762, %v783
    %785 = vdwg.mxu0
    %v786 = vld [vmem:[#allocation2 + $0x250] sm:$0xff]
    %v787 = vld [vmem:[#allocation2 + $0x258] sm:$0xff]
    %v788 = vld [vmem:[#allocation2 + $0x260] sm:$0xff]
    %v789 = vld [vmem:[#allocation2 + $0x268] sm:$0xff]
    %v790 = vld [vmem:[#allocation2 + $0x270] sm:$0xff]
    %v791 = vld [vmem:[#allocation2 + $0x278] sm:$0xff]
    %v792 = vld [vmem:[#allocation2 + $0x280] sm:$0xff]
    %v793 = vld [vmem:[#allocation2 + $0x288] sm:$0xff]
    %v795 = vsel %vm741, %v721, 0
    %797 = vmatpush.msra.mxu0 0.0
    %798 = vmatpush.msra.mxu0 0.0
    %799 = vmatpush.msra.mxu0 0.0
    %800 = vmatpush.msra.mxu0 0.0
    %801 = vmatpush.msra.mxu0 0.0
    %802 = vmatpush.msra.mxu0 0.0
    %803 = vmatpush.msra.mxu0 0.0
    %804 = vmatpush.msra.mxu0 0.0
    %805 = vmatpush.msra.mxu0 %v793
    %806 = vmatpush.msra.mxu0 %v792
    %807 = vmatpush.msra.mxu0 %v791
    %808 = vmatpush.msra.mxu0 %v790
    %809 = vmatpush.msra.mxu0 %v789
    %810 = vmatpush.msra.mxu0 %v788
    %811 = vmatpush.msra.mxu0 %v787
    %812 = vmatpush.msra.mxu0 %v786
    %813 = vmatmul.f32.gmra.mxu0 %v795
    %v814 = vpop.f32.mrf.mxu0
    %v815 = vadd.f32 0.0, %v814
    %816 = vdwg.mxu0
    %v817 = vadd.f32 %v784, %v815
    %819 = vset.pattern.permute.xlu0 0
    %820 = vperm.xlu0 %819, %v692
    %v821 = vpop.permute.xlu0 %820
    %v823 = vadd.f32 %v817, %v821
    %vm824 = vcmp.gt.f32.partialorder %v823, 0.0
    %v825 = vmul.f32 %v823, 1.442695
    %v826 = vpow.pop %v825
    %v827 = vsub.f32 %v826, 1.0
    %v828 = vsel %vm824, %v823, %v827
    %v829 = vld [vmem:[#allocation2 + $0x290] sm:$0xff]
    %v830 = vld [vmem:[#allocation2 + $0x298] sm:$0xff]
    %832 = vset.pattern.permute.xlu0 0
    %833 = vperm.xlu0 %832, %v830
    %v834 = vpop.permute.xlu0 %833
    %vm836 = vcmask 31744
    %v838 = vsel %vm836, %v829, 0
    %vm840 = vcmask 1043456
    %v842 = vsel %vm840, %v828, 0
    %844 = vmatpush.msra.mxu0 0.0
    %845 = vmatpush.msra.mxu0 0.0
    %846 = vmatpush.msra.mxu0 0.0
    %847 = vmatpush.msra.mxu0 0.0
    %848 = vmatpush.msra.mxu0 0.0
    %849 = vmatpush.msra.mxu0 0.0
    %850 = vmatpush.msra.mxu0 0.0
    %851 = vmatpush.msra.mxu0 0.0
    %852 = vmatpush.msra.mxu0 0.0
    %853 = vmatpush.msra.mxu0 0.0
    %854 = vmatpush.msra.mxu0 0.0
    %855 = vmatpush.msra.mxu0 0.0
    %856 = vmatpush.msra.mxu0 0.0
    %857 = vmatpush.msra.mxu0 0.0
    %858 = vmatpush.msra.mxu0 0.0
    %859 = vmatpush.msra.mxu0 %v842
    %860 = vmatmul.f32.gmra.mxu0 %v838
    %v861 = vpop.f32.mrf.mxu0
    %v862 = vadd.f32 %v834, %v861
    %863 = vdwg.mxu0
    %v864 = vadd.f32 %v684, %v862
    %vm865 = vcmp.gt.f32.partialorder %v864, 0.0
    %v866 = vmul.f32 %v864, 1.442695
    %v867 = vpow.pop %v866
    %v868 = vsub.f32 %v867, 1.0
    %v869 = vsel %vm865, %v864, %v868
    %v870 = vld [vmem:[#allocation2 + $0x2a0] sm:$0xff]
    %v871 = vld [vmem:[#allocation2 + $0x2a8] sm:$0xff]
    %v872 = vld [vmem:[#allocation2 + $0x2b0] sm:$0xf]
    %v874 = vsel %vm693, %v870, 0
    %v877 = vsel %vm693, %v871, 0
    %879 = vmatpush.msra.mxu0 0.0
    %880 = vmatpush.msra.mxu0 0.0
    %881 = vmatpush.msra.mxu0 0.0
    %882 = vmatpush.msra.mxu0 0.0
    %883 = vmatpush.msra.mxu0 0.0
    %884 = vmatpush.msra.mxu0 0.0
    %885 = vmatpush.msra.mxu0 0.0
    %886 = vmatpush.msra.mxu0 0.0
    %887 = vmatpush.msra.mxu0 0.0
    %888 = vmatpush.msra.mxu0 0.0
    %889 = vmatpush.msra.mxu0 0.0
    %890 = vmatpush.msra.mxu0 0.0
    %891 = vmatpush.msra.mxu0 0.0
    %892 = vmatpush.msra.mxu0 0.0
    %893 = vmatpush.msra.mxu0 0.0
    %894 = vmatpush.msra.mxu0 %v869
    %895 = vmatmul.f32.gmra.mxu0 %v874
    %v896 = vpop.f32.mrf.mxu0
    %v897 = vadd.f32 0.0, %v896
    %898 = vmatmul.f32.gmra.mxu0 %v877
    %v899 = vpop.f32.mrf.mxu0
    %v900 = vadd.f32 0.0, %v899
    %901 = vdwg.mxu0
    %v902 = vld [vmem:[#allocation2 + $0x2b8] sm:$0xff]
    %v903 = vld [vmem:[#allocation2 + $0x2c0] sm:$0xff]
    %v904 = vld [vmem:[#allocation2 + $0x2c8] sm:$0xff]
    %v905 = vld [vmem:[#allocation2 + $0x2d0] sm:$0xff]
    %v906 = vld [vmem:[#allocation2 + $0x2d8] sm:$0xff]
    %v907 = vld [vmem:[#allocation2 + $0x2e0] sm:$0xff]
    %v908 = vld [vmem:[#allocation2 + $0x2e8] sm:$0xff]
    %v909 = vld [vmem:[#allocation2 + $0x2f0] sm:$0xff]
    %v910 = vld [vmem:[#allocation2 + $0x2f8] sm:$0xff]
    %v911 = vld [vmem:[#allocation2 + $0x300] sm:$0xff]
    %v912 = vld [vmem:[#allocation2 + $0x308] sm:$0xff]
    %v913 = vld [vmem:[#allocation2 + $0x310] sm:$0xff]
    %v914 = vld [vmem:[#allocation2 + $0x318] sm:$0xff]
    %v915 = vld [vmem:[#allocation2 + $0x320] sm:$0xff]
    %v916 = vld [vmem:[#allocation2 + $0x328] sm:$0xff]
    %v917 = vld [vmem:[#allocation2 + $0x330] sm:$0xff]
    %v919 = vrot.slane %v897, 4
    %v920 = vsel %vm741, %v919, 0
    %922 = vmatpush.msra.mxu0 0.0
    %923 = vmatpush.msra.mxu0 0.0
    %924 = vmatpush.msra.mxu0 0.0
    %925 = vmatpush.msra.mxu0 0.0
    %926 = vmatpush.msra.mxu0 0.0
    %927 = vmatpush.msra.mxu0 0.0
    %928 = vmatpush.msra.mxu0 0.0
    %929 = vmatpush.msra.mxu0 0.0
    %930 = vmatpush.msra.mxu0 %v917
    %931 = vmatpush.msra.mxu0 %v916
    %932 = vmatpush.msra.mxu0 %v915
    %933 = vmatpush.msra.mxu0 %v914
    %934 = vmatpush.msra.mxu0 %v913
    %935 = vmatpush.msra.mxu0 %v912
    %936 = vmatpush.msra.mxu0 %v911
    %937 = vmatpush.msra.mxu0 %v910
    %938 = vmatmul.f32.gmra.mxu0 %v920
    %v939 = vpop.f32.mrf.mxu0
    %v940 = vadd.f32 0.0, %v939
    %941 = vdwg.mxu0
    %v942 = vsel %vm741, %v897, 0
    %944 = vmatpush.msra.mxu0 0.0
    %945 = vmatpush.msra.mxu0 0.0
    %946 = vmatpush.msra.mxu0 0.0
    %947 = vmatpush.msra.mxu0 0.0
    %948 = vmatpush.msra.mxu0 0.0
    %949 = vmatpush.msra.mxu0 0.0
    %950 = vmatpush.msra.mxu0 0.0
    %951 = vmatpush.msra.mxu0 0.0
    %952 = vmatpush.msra.mxu0 %v909
    %953 = vmatpush.msra.mxu0 %v908
    %954 = vmatpush.msra.mxu0 %v907
    %955 = vmatpush.msra.mxu0 %v906
    %956 = vmatpush.msra.mxu0 %v905
    %957 = vmatpush.msra.mxu0 %v904
    %958 = vmatpush.msra.mxu0 %v903
    %959 = vmatpush.msra.mxu0 %v902
    %960 = vmatmul.f32.gmra.mxu0 %v942
    %v961 = vpop.f32.mrf.mxu0
    %v962 = vadd.f32 %v940, %v961
    %963 = vdwg.mxu0
    %v964 = vld [vmem:[#allocation2 + $0x338] sm:$0xff]
    %v965 = vld [vmem:[#allocation2 + $0x340] sm:$0xff]
    %v966 = vld [vmem:[#allocation2 + $0x348] sm:$0xff]
    %v967 = vld [vmem:[#allocation2 + $0x350] sm:$0xff]
    %v968 = vld [vmem:[#allocation2 + $0x358] sm:$0xff]
    %v969 = vld [vmem:[#allocation2 + $0x360] sm:$0xff]
    %v970 = vld [vmem:[#allocation2 + $0x368] sm:$0xff]
    %v971 = vld [vmem:[#allocation2 + $0x370] sm:$0xff]
    %v973 = vsel %vm741, %v900, 0
    %975 = vmatpush.msra.mxu0 0.0
    %976 = vmatpush.msra.mxu0 0.0
    %977 = vmatpush.msra.mxu0 0.0
    %978 = vmatpush.msra.mxu0 0.0
    %979 = vmatpush.msra.mxu0 0.0
    %980 = vmatpush.msra.mxu0 0.0
    %981 = vmatpush.msra.mxu0 0.0
    %982 = vmatpush.msra.mxu0 0.0
    %983 = vmatpush.msra.mxu0 %v971
    %984 = vmatpush.msra.mxu0 %v970
    %985 = vmatpush.msra.mxu0 %v969
    %986 = vmatpush.msra.mxu0 %v968
    %987 = vmatpush.msra.mxu0 %v967
    %988 = vmatpush.msra.mxu0 %v966
    %989 = vmatpush.msra.mxu0 %v965
    %990 = vmatpush.msra.mxu0 %v964
    %991 = vmatmul.f32.gmra.mxu0 %v973
    %v992 = vpop.f32.mrf.mxu0
    %v993 = vadd.f32 0.0, %v992
    %994 = vdwg.mxu0
    %v995 = vadd.f32 %v962, %v993
    %v996 = vld [vmem:[#allocation2 + $0x378] sm:$0xff]
    %v997 = vld [vmem:[#allocation2 + $0x380] sm:$0xff]
    %v998 = vld [vmem:[#allocation2 + $0x388] sm:$0xff]
    %v999 = vld [vmem:[#allocation2 + $0x390] sm:$0xff]
    %v1000 = vld [vmem:[#allocation2 + $0x398] sm:$0xff]
    %v1001 = vld [vmem:[#allocation2 + $0x3a0] sm:$0xff]
    %v1002 = vld [vmem:[#allocation2 + $0x3a8] sm:$0xff]
    %v1003 = vld [vmem:[#allocation2 + $0x3b0] sm:$0xff]
    %v1004 = vrot.slane %v900, 4
    %v1005 = vsel %vm741, %v1004, 0
    %1007 = vmatpush.msra.mxu0 0.0
    %1008 = vmatpush.msra.mxu0 0.0
    %1009 = vmatpush.msra.mxu0 0.0
    %1010 = vmatpush.msra.mxu0 0.0
    %1011 = vmatpush.msra.mxu0 0.0
    %1012 = vmatpush.msra.mxu0 0.0
    %1013 = vmatpush.msra.mxu0 0.0
    %1014 = vmatpush.msra.mxu0 0.0
    %1015 = vmatpush.msra.mxu0 %v1003
    %1016 = vmatpush.msra.mxu0 %v1002
    %1017 = vmatpush.msra.mxu0 %v1001
    %1018 = vmatpush.msra.mxu0 %v1000
    %1019 = vmatpush.msra.mxu0 %v999
    %1020 = vmatpush.msra.mxu0 %v998
    %1021 = vmatpush.msra.mxu0 %v997
    %1022 = vmatpush.msra.mxu0 %v996
    %1023 = vmatmul.f32.gmra.mxu0 %v1005
    %v1024 = vpop.f32.mrf.mxu0
    %v1025 = vadd.f32 0.0, %v1024
    %1026 = vdwg.mxu0
    %v1027 = vadd.f32 %v995, %v1025
    %1029 = vset.pattern.permute.xlu0 0
    %1030 = vperm.xlu0 %1029, %v872
    %v1031 = vpop.permute.xlu0 %1030
    %v1033 = vadd.f32 %v1027, %v1031
    %vm1034 = vcmp.gt.f32.partialorder %v1033, 0.0
    %v1035 = vmul.f32 %v1033, 1.442695
    %v1036 = vpow.pop %v1035
    %v1037 = vsub.f32 %v1036, 1.0
    %v1038 = vsel %vm1034, %v1033, %v1037
    %v1039 = vld [vmem:[#allocation2 + $0x3b8] sm:$0x3f]
    %v1040 = vld [vmem:[#allocation2 + $0x3c0] sm:$0x3]
    %v1042 = vsel %vm836, %v1039, 0
    %v1045 = vsel %vm840, %v1038, 0
    %1047 = vmatpush.msra.mxu0 0.0
    %1048 = vmatpush.msra.mxu0 0.0
    %1049 = vmatpush.msra.mxu0 0.0
    %1050 = vmatpush.msra.mxu0 0.0
    %1051 = vmatpush.msra.mxu0 0.0
    %1052 = vmatpush.msra.mxu0 0.0
    %1053 = vmatpush.msra.mxu0 0.0
    %1054 = vmatpush.msra.mxu0 0.0
    %1055 = vmatpush.msra.mxu0 0.0
    %1056 = vmatpush.msra.mxu0 0.0
    %1057 = vmatpush.msra.mxu0 0.0
    %1058 = vmatpush.msra.mxu0 0.0
    %1059 = vmatpush.msra.mxu0 0.0
    %1060 = vmatpush.msra.mxu0 0.0
    %1061 = vmatpush.msra.mxu0 0.0
    %1062 = vmatpush.msra.mxu0 %v1045
    %1063 = vmatmul.f32.gmra.mxu0 %v1042
    %v1064 = vpop.f32.mrf.mxu0
    %v1065 = vadd.f32 0.0, %v1064
    %1066 = vdwg.mxu0
    %v1067 = vld [vmem:[#allocation2 + $0x3c8] sm:$0xff]
    %v1068 = vld [vmem:[#allocation2 + $0x3d0] sm:$0xff]
    %v1069 = vld [vmem:[#allocation2 + $0x3d8] sm:$0xff]
    %v1070 = vld [vmem:[#allocation2 + $0x3e0] sm:$0xff]
    %v1071 = vld [vmem:[#allocation2 + $0x3e8] sm:$0xff]
    %v1072 = vld [vmem:[#allocation2 + $0x3f0] sm:$0xff]
    %v1073 = vld [vmem:[#allocation2 + $0x3f8] sm:$0xff]
    %v1074 = vld [vmem:[#allocation2 + $0x400] sm:$0xff]
    %v1075 = vld [vmem:[#allocation2 + $0x408] sm:$0xff]
    %v1076 = vld [vmem:[#allocation2 + $0x410] sm:$0xff]
    %v1077 = vld [vmem:[#allocation2 + $0x418] sm:$0xff]
    %v1078 = vld [vmem:[#allocation2 + $0x420] sm:$0xff]
    %v1079 = vld [vmem:[#allocation2 + $0x428] sm:$0xff]
    %v1080 = vld [vmem:[#allocation2 + $0x430] sm:$0xff]
    %v1081 = vld [vmem:[#allocation2 + $0x438] sm:$0xff]
    %v1082 = vld [vmem:[#allocation2 + $0x440] sm:$0xff]
    %v1083 = vld [vmem:[#allocation2 + $0x448] sm:$0xff]
    %v1084 = vld [vmem:[#allocation2 + $0x450] sm:$0xff]
    %v1085 = vld [vmem:[#allocation2 + $0x458] sm:$0xff]
    %v1086 = vld [vmem:[#allocation2 + $0x460] sm:$0xff]
    %v1087 = vld [vmem:[#allocation2 + $0x468] sm:$0xff]
    %v1088 = vld [vmem:[#allocation2 + $0x470] sm:$0xff]
    %v1089 = vld [vmem:[#allocation2 + $0x478] sm:$0xff]
    %v1090 = vld [vmem:[#allocation2 + $0x480] sm:$0xff]
    %v1091 = vld [vmem:[#allocation2 + $0x488] sm:$0xff]
    %v1092 = vld [vmem:[#allocation2 + $0x490] sm:$0xff]
    %v1093 = vld [vmem:[#allocation2 + $0x498] sm:$0xff]
    %v1094 = vld [vmem:[#allocation2 + $0x4a0] sm:$0xff]
    %v1095 = vld [vmem:[#allocation2 + $0x4a8] sm:$0xff]
    %v1096 = vld [vmem:[#allocation2 + $0x4b0] sm:$0xff]
    %v1097 = vld [vmem:[#allocation2 + $0x4b8] sm:$0xff]
    %v1098 = vld [vmem:[#allocation2 + $0x4c0] sm:$0xff]
    %v1100 = vrot.slane %v1065, 2
    %1102 = vmatpush.msra.mxu0 %v1098
    %1103 = vmatpush.msra.mxu0 %v1097
    %1104 = vmatpush.msra.mxu0 %v1096
    %1105 = vmatpush.msra.mxu0 %v1095
    %1106 = vmatpush.msra.mxu0 %v1094
    %1107 = vmatpush.msra.mxu0 %v1093
    %1108 = vmatpush.msra.mxu0 %v1092
    %1109 = vmatpush.msra.mxu0 %v1091
    %1110 = vmatpush.msra.mxu0 %v1090
    %1111 = vmatpush.msra.mxu0 %v1089
    %1112 = vmatpush.msra.mxu0 %v1088
    %1113 = vmatpush.msra.mxu0 %v1087
    %1114 = vmatpush.msra.mxu0 %v1086
    %1115 = vmatpush.msra.mxu0 %v1085
    %1116 = vmatpush.msra.mxu0 %v1084
    %1117 = vmatpush.msra.mxu0 %v1083
    %1118 = vmatmul.f32.gmra.mxu0 %v1100
    %v1119 = vpop.f32.mrf.mxu0
    %v1120 = vadd.f32 0.0, %v1119
    %1121 = vdwg.mxu0
    %1122 = vmatpush.msra.mxu0 %v1082
    %1123 = vmatpush.msra.mxu0 %v1081
    %1124 = vmatpush.msra.mxu0 %v1080
    %1125 = vmatpush.msra.mxu0 %v1079
    %1126 = vmatpush.msra.mxu0 %v1078
    %1127 = vmatpush.msra.mxu0 %v1077
    %1128 = vmatpush.msra.mxu0 %v1076
    %1129 = vmatpush.msra.mxu0 %v1075
    %1130 = vmatpush.msra.mxu0 %v1074
    %1131 = vmatpush.msra.mxu0 %v1073
    %1132 = vmatpush.msra.mxu0 %v1072
    %1133 = vmatpush.msra.mxu0 %v1071
    %1134 = vmatpush.msra.mxu0 %v1070
    %1135 = vmatpush.msra.mxu0 %v1069
    %1136 = vmatpush.msra.mxu0 %v1068
    %1137 = vmatpush.msra.mxu0 %v1067
    %1138 = vmatmul.f32.gmra.mxu0 %v1065
    %v1139 = vpop.f32.mrf.mxu0
    %v1140 = vadd.f32 %v1120, %v1139
    %1141 = vdwg.mxu0
    %v1142 = vld [vmem:[#allocation2 + $0x4c8] sm:$0xff]
    %v1143 = vld [vmem:[#allocation2 + $0x4d0] sm:$0xff]
    %v1144 = vld [vmem:[#allocation2 + $0x4d8] sm:$0xff]
    %v1145 = vld [vmem:[#allocation2 + $0x4e0] sm:$0xff]
    %v1146 = vld [vmem:[#allocation2 + $0x4e8] sm:$0xff]
    %v1147 = vld [vmem:[#allocation2 + $0x4f0] sm:$0xff]
    %v1148 = vld [vmem:[#allocation2 + $0x4f8] sm:$0xff]
    %v1149 = vld [vmem:[#allocation2 + $0x500] sm:$0xff]
    %v1150 = vld [vmem:[#allocation2 + $0x508] sm:$0xff]
    %v1151 = vld [vmem:[#allocation2 + $0x510] sm:$0xff]
    %v1152 = vld [vmem:[#allocation2 + $0x518] sm:$0xff]
    %v1153 = vld [vmem:[#allocation2 + $0x520] sm:$0xff]
    %v1154 = vld [vmem:[#allocation2 + $0x528] sm:$0xff]
    %v1155 = vld [vmem:[#allocation2 + $0x530] sm:$0xff]
    %v1156 = vld [vmem:[#allocation2 + $0x538] sm:$0xff]
    %v1157 = vld [vmem:[#allocation2 + $0x540] sm:$0xff]
    %v1158 = vrot.slane %v1065, 4
    %1160 = vmatpush.msra.mxu0 %v1157
    %1161 = vmatpush.msra.mxu0 %v1156
    %1162 = vmatpush.msra.mxu0 %v1155
    %1163 = vmatpush.msra.mxu0 %v1154
    %1164 = vmatpush.msra.mxu0 %v1153
    %1165 = vmatpush.msra.mxu0 %v1152
    %1166 = vmatpush.msra.mxu0 %v1151
    %1167 = vmatpush.msra.mxu0 %v1150
    %1168 = vmatpush.msra.mxu0 %v1149
    %1169 = vmatpush.msra.mxu0 %v1148
    %1170 = vmatpush.msra.mxu0 %v1147
    %1171 = vmatpush.msra.mxu0 %v1146
    %1172 = vmatpush.msra.mxu0 %v1145
    %1173 = vmatpush.msra.mxu0 %v1144
    %1174 = vmatpush.msra.mxu0 %v1143
    %1175 = vmatpush.msra.mxu0 %v1142
    %1176 = vmatmul.f32.gmra.mxu0 %v1158
    %v1177 = vpop.f32.mrf.mxu0
    %v1178 = vadd.f32 0.0, %v1177
    %1179 = vdwg.mxu0
    %v1180 = vadd.f32 %v1140, %v1178
    %1182 = vset.pattern.permute.xlu0 0
    %1183 = vperm.xlu0 %1182, %v1040
    %v1184 = vpop.permute.xlu0 %1183
    %v1186 = vadd.f32 %v1180, %v1184
    %vm1187 = vcmp.gt.f32.partialorder %v1186, 0.0
    %v1188 = vmul.f32 %v1186, 1.442695
    %v1189 = vpow.pop %v1188
    %v1190 = vsub.f32 %v1189, 1.0
    %v1191 = vsel %vm1187, %v1186, %v1190
    %v1192 = vld [vmem:[#allocation2 + $0x548] sm:$0xf]
    %v1193 = vld [vmem:[#allocation2 + $0x550] sm:$0xf]
    %1195 = vset.pattern.permute.xlu0 0
    %1196 = vperm.xlu0 %1195, %v1193
    %v1197 = vpop.permute.xlu0 %1196
    %vm1199 = vcmask 15360
    %v1201 = vsel %vm1199, %v1192, 0
    %vm1203 = vcmask 1041408
    %v1205 = vsel %vm1203, %v1191, 0
    %1207 = vmatpush.msra.mxu0 0.0
    %1208 = vmatpush.msra.mxu0 0.0
    %1209 = vmatpush.msra.mxu0 0.0
    %1210 = vmatpush.msra.mxu0 0.0
    %1211 = vmatpush.msra.mxu0 0.0
    %1212 = vmatpush.msra.mxu0 0.0
    %1213 = vmatpush.msra.mxu0 0.0
    %1214 = vmatpush.msra.mxu0 0.0
    %1215 = vmatpush.msra.mxu0 0.0
    %1216 = vmatpush.msra.mxu0 0.0
    %1217 = vmatpush.msra.mxu0 0.0
    %1218 = vmatpush.msra.mxu0 0.0
    %1219 = vmatpush.msra.mxu0 0.0
    %1220 = vmatpush.msra.mxu0 0.0
    %1221 = vmatpush.msra.mxu0 0.0
    %1222 = vmatpush.msra.mxu0 %v1205
    %1223 = vmatmul.f32.gmra.mxu0 %v1201
    %v1224 = vpop.f32.mrf.mxu0
    %v1225 = vadd.f32 %v1197, %v1224
    %1226 = vdwg.mxu0
    %v1227 = vadd.f32 %v1033, %v1225
    %vm1228 = vcmp.gt.f32.partialorder %v1227, 0.0
    %v1229 = vmul.f32 %v1227, 1.442695
    %v1230 = vpow.pop %v1229
    %v1231 = vsub.f32 %v1230, 1.0
    %v1232 = vsel %vm1228, %v1227, %v1231
    %v1233 = vld [vmem:[#allocation2 + $0x558] sm:$0x7f]
    %v1234 = vld [vmem:[#allocation2 + $0x560] sm:$0x1]
    %v1236 = vsel %vm836, %v1233, 0
    %v1239 = vsel %vm840, %v1232, 0
    %1241 = vmatpush.msra.mxu0 0.0
    %1242 = vmatpush.msra.mxu0 0.0
    %1243 = vmatpush.msra.mxu0 0.0
    %1244 = vmatpush.msra.mxu0 0.0
    %1245 = vmatpush.msra.mxu0 0.0
    %1246 = vmatpush.msra.mxu0 0.0
    %1247 = vmatpush.msra.mxu0 0.0
    %1248 = vmatpush.msra.mxu0 0.0
    %1249 = vmatpush.msra.mxu0 0.0
    %1250 = vmatpush.msra.mxu0 0.0
    %1251 = vmatpush.msra.mxu0 0.0
    %1252 = vmatpush.msra.mxu0 0.0
    %1253 = vmatpush.msra.mxu0 0.0
    %1254 = vmatpush.msra.mxu0 0.0
    %1255 = vmatpush.msra.mxu0 0.0
    %1256 = vmatpush.msra.mxu0 %v1239
    %1257 = vmatmul.f32.gmra.mxu0 %v1236
    %v1258 = vpop.f32.mrf.mxu0
    %v1259 = vadd.f32 0.0, %v1258
    %1260 = vdwg.mxu0
    %v1261 = vld [vmem:[#allocation2 + $0x568] sm:$0xff]
    %v1262 = vld [vmem:[#allocation2 + $0x570] sm:$0xff]
    %v1263 = vld [vmem:[#allocation2 + $0x578] sm:$0xff]
    %v1264 = vld [vmem:[#allocation2 + $0x580] sm:$0xff]
    %v1265 = vld [vmem:[#allocation2 + $0x588] sm:$0xff]
    %v1266 = vld [vmem:[#allocation2 + $0x590] sm:$0xff]
    %v1267 = vld [vmem:[#allocation2 + $0x598] sm:$0xff]
    %v1268 = vld [vmem:[#allocation2 + $0x5a0] sm:$0xff]
    %v1269 = vld [vmem:[#allocation2 + $0x5a8] sm:$0xff]
    %v1270 = vld [vmem:[#allocation2 + $0x5b0] sm:$0xff]
    %v1271 = vld [vmem:[#allocation2 + $0x5b8] sm:$0xff]
    %v1272 = vld [vmem:[#allocation2 + $0x5c0] sm:$0xff]
    %v1273 = vld [vmem:[#allocation2 + $0x5c8] sm:$0xff]
    %v1274 = vld [vmem:[#allocation2 + $0x5d0] sm:$0xff]
    %v1275 = vld [vmem:[#allocation2 + $0x5d8] sm:$0xff]
    %v1276 = vld [vmem:[#allocation2 + $0x5e0] sm:$0xff]
    %v1277 = vld [vmem:[#allocation2 + $0x5e8] sm:$0xff]
    %v1278 = vld [vmem:[#allocation2 + $0x5f0] sm:$0xff]
    %v1279 = vld [vmem:[#allocation2 + $0x5f8] sm:$0xff]
    %v1280 = vld [vmem:[#allocation2 + $0x600] sm:$0xff]
    %v1281 = vld [vmem:[#allocation2 + $0x608] sm:$0xff]
    %v1282 = vld [vmem:[#allocation2 + $0x610] sm:$0xff]
    %v1283 = vld [vmem:[#allocation2 + $0x618] sm:$0xff]
    %v1284 = vld [vmem:[#allocation2 + $0x620] sm:$0xff]
    %v1285 = vld [vmem:[#allocation2 + $0x628] sm:$0xff]
    %v1286 = vld [vmem:[#allocation2 + $0x630] sm:$0xff]
    %v1287 = vld [vmem:[#allocation2 + $0x638] sm:$0xff]
    %v1288 = vld [vmem:[#allocation2 + $0x640] sm:$0xff]
    %v1289 = vld [vmem:[#allocation2 + $0x648] sm:$0xff]
    %v1290 = vld [vmem:[#allocation2 + $0x650] sm:$0xff]
    %v1291 = vld [vmem:[#allocation2 + $0x658] sm:$0xff]
    %v1292 = vld [vmem:[#allocation2 + $0x660] sm:$0xff]
    %v1294 = vrot.slane %v1259, 1
    %1296 = vmatpush.msra.mxu0 %v1292
    %1297 = vmatpush.msra.mxu0 %v1291
    %1298 = vmatpush.msra.mxu0 %v1290
    %1299 = vmatpush.msra.mxu0 %v1289
    %1300 = vmatpush.msra.mxu0 %v1288
    %1301 = vmatpush.msra.mxu0 %v1287
    %1302 = vmatpush.msra.mxu0 %v1286
    %1303 = vmatpush.msra.mxu0 %v1285
    %1304 = vmatpush.msra.mxu0 %v1284
    %1305 = vmatpush.msra.mxu0 %v1283
    %1306 = vmatpush.msra.mxu0 %v1282
    %1307 = vmatpush.msra.mxu0 %v1281
    %1308 = vmatpush.msra.mxu0 %v1280
    %1309 = vmatpush.msra.mxu0 %v1279
    %1310 = vmatpush.msra.mxu0 %v1278
    %1311 = vmatpush.msra.mxu0 %v1277
    %1312 = vmatmul.f32.gmra.mxu0 %v1294
    %v1313 = vpop.f32.mrf.mxu0
    %v1314 = vadd.f32 0.0, %v1313
    %1315 = vdwg.mxu0
    %1316 = vmatpush.msra.mxu0 %v1276
    %1317 = vmatpush.msra.mxu0 %v1275
    %1318 = vmatpush.msra.mxu0 %v1274
    %1319 = vmatpush.msra.mxu0 %v1273
    %1320 = vmatpush.msra.mxu0 %v1272
    %1321 = vmatpush.msra.mxu0 %v1271
    %1322 = vmatpush.msra.mxu0 %v1270
    %1323 = vmatpush.msra.mxu0 %v1269
    %1324 = vmatpush.msra.mxu0 %v1268
    %1325 = vmatpush.msra.mxu0 %v1267
    %1326 = vmatpush.msra.mxu0 %v1266
    %1327 = vmatpush.msra.mxu0 %v1265
    %1328 = vmatpush.msra.mxu0 %v1264
    %1329 = vmatpush.msra.mxu0 %v1263
    %1330 = vmatpush.msra.mxu0 %v1262
    %1331 = vmatpush.msra.mxu0 %v1261
    %1332 = vmatmul.f32.gmra.mxu0 %v1259
    %v1333 = vpop.f32.mrf.mxu0
    %v1334 = vadd.f32 %v1314, %v1333
    %1335 = vdwg.mxu0
    %v1336 = vld [vmem:[#allocation2 + $0x668] sm:$0xff]
    %v1337 = vld [vmem:[#allocation2 + $0x670] sm:$0xff]
    %v1338 = vld [vmem:[#allocation2 + $0x678] sm:$0xff]
    %v1339 = vld [vmem:[#allocation2 + $0x680] sm:$0xff]
    %v1340 = vld [vmem:[#allocation2 + $0x688] sm:$0xff]
    %v1341 = vld [vmem:[#allocation2 + $0x690] sm:$0xff]
    %v1342 = vld [vmem:[#allocation2 + $0x698] sm:$0xff]
    %v1343 = vld [vmem:[#allocation2 + $0x6a0] sm:$0xff]
    %v1344 = vld [vmem:[#allocation2 + $0x6a8] sm:$0xff]
    %v1345 = vld [vmem:[#allocation2 + $0x6b0] sm:$0xff]
    %v1346 = vld [vmem:[#allocation2 + $0x6b8] sm:$0xff]
    %v1347 = vld [vmem:[#allocation2 + $0x6c0] sm:$0xff]
    %v1348 = vld [vmem:[#allocation2 + $0x6c8] sm:$0xff]
    %v1349 = vld [vmem:[#allocation2 + $0x6d0] sm:$0xff]
    %v1350 = vld [vmem:[#allocation2 + $0x6d8] sm:$0xff]
    %v1351 = vld [vmem:[#allocation2 + $0x6e0] sm:$0xff]
    %v1352 = vrot.slane %v1259, 2
    %1354 = vmatpush.msra.mxu0 %v1351
    %1355 = vmatpush.msra.mxu0 %v1350
    %1356 = vmatpush.msra.mxu0 %v1349
    %1357 = vmatpush.msra.mxu0 %v1348
    %1358 = vmatpush.msra.mxu0 %v1347
    %1359 = vmatpush.msra.mxu0 %v1346
    %1360 = vmatpush.msra.mxu0 %v1345
    %1361 = vmatpush.msra.mxu0 %v1344
    %1362 = vmatpush.msra.mxu0 %v1343
    %1363 = vmatpush.msra.mxu0 %v1342
    %1364 = vmatpush.msra.mxu0 %v1341
    %1365 = vmatpush.msra.mxu0 %v1340
    %1366 = vmatpush.msra.mxu0 %v1339
    %1367 = vmatpush.msra.mxu0 %v1338
    %1368 = vmatpush.msra.mxu0 %v1337
    %1369 = vmatpush.msra.mxu0 %v1336
    %1370 = vmatmul.f32.gmra.mxu0 %v1352
    %v1371 = vpop.f32.mrf.mxu0
    %v1372 = vadd.f32 0.0, %v1371
    %1373 = vdwg.mxu0
    %v1374 = vadd.f32 %v1334, %v1372
    %v1375 = vld [vmem:[#allocation2 + $0x6e8] sm:$0xff]
    %v1376 = vld [vmem:[#allocation2 + $0x6f0] sm:$0xff]
    %v1377 = vld [vmem:[#allocation2 + $0x6f8] sm:$0xff]
    %v1378 = vld [vmem:[#allocation2 + $0x700] sm:$0xff]
    %v1379 = vld [vmem:[#allocation2 + $0x708] sm:$0xff]
    %v1380 = vld [vmem:[#allocation2 + $0x710] sm:$0xff]
    %v1381 = vld [vmem:[#allocation2 + $0x718] sm:$0xff]
    %v1382 = vld [vmem:[#allocation2 + $0x720] sm:$0xff]
    %v1383 = vld [vmem:[#allocation2 + $0x728] sm:$0xff]
    %v1384 = vld [vmem:[#allocation2 + $0x730] sm:$0xff]
    %v1385 = vld [vmem:[#allocation2 + $0x738] sm:$0xff]
    %v1386 = vld [vmem:[#allocation2 + $0x740] sm:$0xff]
    %v1387 = vld [vmem:[#allocation2 + $0x748] sm:$0xff]
    %v1388 = vld [vmem:[#allocation2 + $0x750] sm:$0xff]
    %v1389 = vld [vmem:[#allocation2 + $0x758] sm:$0xff]
    %v1390 = vld [vmem:[#allocation2 + $0x760] sm:$0xff]
    %v1391 = vrot.slane %v1259, 3
    %1393 = vmatpush.msra.mxu0 %v1390
    %1394 = vmatpush.msra.mxu0 %v1389
    %1395 = vmatpush.msra.mxu0 %v1388
    %1396 = vmatpush.msra.mxu0 %v1387
    %1397 = vmatpush.msra.mxu0 %v1386
    %1398 = vmatpush.msra.mxu0 %v1385
    %1399 = vmatpush.msra.mxu0 %v1384
    %1400 = vmatpush.msra.mxu0 %v1383
    %1401 = vmatpush.msra.mxu0 %v1382
    %1402 = vmatpush.msra.mxu0 %v1381
    %1403 = vmatpush.msra.mxu0 %v1380
    %1404 = vmatpush.msra.mxu0 %v1379
    %1405 = vmatpush.msra.mxu0 %v1378
    %1406 = vmatpush.msra.mxu0 %v1377
    %1407 = vmatpush.msra.mxu0 %v1376
    %1408 = vmatpush.msra.mxu0 %v1375
    %1409 = vmatmul.f32.gmra.mxu0 %v1391
    %v1410 = vpop.f32.mrf.mxu0
    %v1411 = vadd.f32 0.0, %v1410
    %1412 = vdwg.mxu0
    %v1413 = vadd.f32 %v1374, %v1411
    %v1414 = vld [vmem:[#allocation2 + $0x768] sm:$0xff]
    %v1415 = vld [vmem:[#allocation2 + $0x770] sm:$0xff]
    %v1416 = vld [vmem:[#allocation2 + $0x778] sm:$0xff]
    %v1417 = vld [vmem:[#allocation2 + $0x780] sm:$0xff]
    %v1418 = vld [vmem:[#allocation2 + $0x788] sm:$0xff]
    %v1419 = vld [vmem:[#allocation2 + $0x790] sm:$0xff]
    %v1420 = vld [vmem:[#allocation2 + $0x798] sm:$0xff]
    %v1421 = vld [vmem:[#allocation2 + $0x7a0] sm:$0xff]
    %v1422 = vld [vmem:[#allocation2 + $0x7a8] sm:$0xff]
    %v1423 = vld [vmem:[#allocation2 + $0x7b0] sm:$0xff]
    %v1424 = vld [vmem:[#allocation2 + $0x7b8] sm:$0xff]
    %v1425 = vld [vmem:[#allocation2 + $0x7c0] sm:$0xff]
    %v1426 = vld [vmem:[#allocation2 + $0x7c8] sm:$0xff]
    %v1427 = vld [vmem:[#allocation2 + $0x7d0] sm:$0xff]
    %v1428 = vld [vmem:[#allocation2 + $0x7d8] sm:$0xff]
    %v1429 = vld [vmem:[#allocation2 + $0x7e0] sm:$0xff]
    %v1430 = vrot.slane %v1259, 4
    %1432 = vmatpush.msra.mxu0 %v1429
    %1433 = vmatpush.msra.mxu0 %v1428
    %1434 = vmatpush.msra.mxu0 %v1427
    %1435 = vmatpush.msra.mxu0 %v1426
    %1436 = vmatpush.msra.mxu0 %v1425
    %1437 = vmatpush.msra.mxu0 %v1424
    %1438 = vmatpush.msra.mxu0 %v1423
    %1439 = vmatpush.msra.mxu0 %v1422
    %1440 = vmatpush.msra.mxu0 %v1421
    %1441 = vmatpush.msra.mxu0 %v1420
    %1442 = vmatpush.msra.mxu0 %v1419
    %1443 = vmatpush.msra.mxu0 %v1418
    %1444 = vmatpush.msra.mxu0 %v1417
    %1445 = vmatpush.msra.mxu0 %v1416
    %1446 = vmatpush.msra.mxu0 %v1415
    %1447 = vmatpush.msra.mxu0 %v1414
    %1448 = vmatmul.f32.gmra.mxu0 %v1430
    %v1449 = vpop.f32.mrf.mxu0
    %v1450 = vadd.f32 0.0, %v1449
    %1451 = vdwg.mxu0
    %v1452 = vadd.f32 %v1413, %v1450
    %v1453 = vld [vmem:[#allocation2 + $0x7e8] sm:$0xff]
    %v1454 = vld [vmem:[#allocation2 + $0x7f0] sm:$0xff]
    %v1455 = vld [vmem:[#allocation2 + $0x7f8] sm:$0xff]
    %v1456 = vld [vmem:[#allocation2 + $0x800] sm:$0xff]
    %v1457 = vld [vmem:[#allocation2 + $0x808] sm:$0xff]
    %v1458 = vld [vmem:[#allocation2 + $0x810] sm:$0xff]
    %v1459 = vld [vmem:[#allocation2 + $0x818] sm:$0xff]
    %v1460 = vld [vmem:[#allocation2 + $0x820] sm:$0xff]
    %v1461 = vld [vmem:[#allocation2 + $0x828] sm:$0xff]
    %v1462 = vld [vmem:[#allocation2 + $0x830] sm:$0xff]
    %v1463 = vld [vmem:[#allocation2 + $0x838] sm:$0xff]
    %v1464 = vld [vmem:[#allocation2 + $0x840] sm:$0xff]
    %v1465 = vld [vmem:[#allocation2 + $0x848] sm:$0xff]
    %v1466 = vld [vmem:[#allocation2 + $0x850] sm:$0xff]
    %v1467 = vld [vmem:[#allocation2 + $0x858] sm:$0xff]
    %v1468 = vld [vmem:[#allocation2 + $0x860] sm:$0xff]
    %v1469 = vrot.slane %v1259, 5
    %1471 = vmatpush.msra.mxu0 %v1468
    %1472 = vmatpush.msra.mxu0 %v1467
    %1473 = vmatpush.msra.mxu0 %v1466
    %1474 = vmatpush.msra.mxu0 %v1465
    %1475 = vmatpush.msra.mxu0 %v1464
    %1476 = vmatpush.msra.mxu0 %v1463
    %1477 = vmatpush.msra.mxu0 %v1462
    %1478 = vmatpush.msra.mxu0 %v1461
    %1479 = vmatpush.msra.mxu0 %v1460
    %1480 = vmatpush.msra.mxu0 %v1459
    %1481 = vmatpush.msra.mxu0 %v1458
    %1482 = vmatpush.msra.mxu0 %v1457
    %1483 = vmatpush.msra.mxu0 %v1456
    %1484 = vmatpush.msra.mxu0 %v1455
    %1485 = vmatpush.msra.mxu0 %v1454
    %1486 = vmatpush.msra.mxu0 %v1453
    %1487 = vmatmul.f32.gmra.mxu0 %v1469
    %v1488 = vpop.f32.mrf.mxu0
    %v1489 = vadd.f32 0.0, %v1488
    %1490 = vdwg.mxu0
    %v1491 = vadd.f32 %v1452, %v1489
    %v1492 = vld [vmem:[#allocation2 + $0x868] sm:$0xff]
    %v1493 = vld [vmem:[#allocation2 + $0x870] sm:$0xff]
    %v1494 = vld [vmem:[#allocation2 + $0x878] sm:$0xff]
    %v1495 = vld [vmem:[#allocation2 + $0x880] sm:$0xff]
    %v1496 = vld [vmem:[#allocation2 + $0x888] sm:$0xff]
    %v1497 = vld [vmem:[#allocation2 + $0x890] sm:$0xff]
    %v1498 = vld [vmem:[#allocation2 + $0x898] sm:$0xff]
    %v1499 = vld [vmem:[#allocation2 + $0x8a0] sm:$0xff]
    %v1500 = vld [vmem:[#allocation2 + $0x8a8] sm:$0xff]
    %v1501 = vld [vmem:[#allocation2 + $0x8b0] sm:$0xff]
    %v1502 = vld [vmem:[#allocation2 + $0x8b8] sm:$0xff]
    %v1503 = vld [vmem:[#allocation2 + $0x8c0] sm:$0xff]
    %v1504 = vld [vmem:[#allocation2 + $0x8c8] sm:$0xff]
    %v1505 = vld [vmem:[#allocation2 + $0x8d0] sm:$0xff]
    %v1506 = vld [vmem:[#allocation2 + $0x8d8] sm:$0xff]
    %v1507 = vld [vmem:[#allocation2 + $0x8e0] sm:$0xff]
    %v1508 = vrot.slane %v1259, 6
    %1510 = vmatpush.msra.mxu0 %v1507
    %1511 = vmatpush.msra.mxu0 %v1506
    %1512 = vmatpush.msra.mxu0 %v1505
    %1513 = vmatpush.msra.mxu0 %v1504
    %1514 = vmatpush.msra.mxu0 %v1503
    %1515 = vmatpush.msra.mxu0 %v1502
    %1516 = vmatpush.msra.mxu0 %v1501
    %1517 = vmatpush.msra.mxu0 %v1500
    %1518 = vmatpush.msra.mxu0 %v1499
    %1519 = vmatpush.msra.mxu0 %v1498
    %1520 = vmatpush.msra.mxu0 %v1497
    %1521 = vmatpush.msra.mxu0 %v1496
    %1522 = vmatpush.msra.mxu0 %v1495
    %1523 = vmatpush.msra.mxu0 %v1494
    %1524 = vmatpush.msra.mxu0 %v1493
    %1525 = vmatpush.msra.mxu0 %v1492
    %1526 = vmatmul.f32.gmra.mxu0 %v1508
    %v1527 = vpop.f32.mrf.mxu0
    %v1528 = vadd.f32 0.0, %v1527
    %1529 = vdwg.mxu0
    %v1530 = vadd.f32 %v1491, %v1528
    %1532 = vset.pattern.permute.xlu0 0
    %1533 = vperm.xlu0 %1532, %v1234
    %v1534 = vpop.permute.xlu0 %1533
    %v1536 = vadd.f32 %v1530, %v1534
    %1537 = vst [vmem:[%s2] sm:$0x1] %v1536
    // Predicated region
    $region14: #{_lambda_.1} parent=1 // pred_check
      _
    $region15: #{_lambda_.1} parent=1 // pred_check_branch
      %1539 = sbr.rel (0) target = $region17
    $region16: #{_lambda_.1} parent=1 // pred_region
      _
    $region17: #{_lambda_.1} parent=1 // pred_fallthru
      _
    // Predicated region
    $region18: #{_lambda_.1} parent=1 // pred_check
      _
    $region19: #{_lambda_.1} parent=1 // pred_check_branch
      %1541 = sbr.rel (0) target = $region21
    $region20: #{_lambda_.1} parent=1 // pred_region
      _
    $region21: #{_lambda_.1} parent=1 // pred_fallthru
      _
    %1542 = vsyncpa [#allocation3], 1

</llo_original>
